<compile_context>
chip_gen: v7x
topology: tpu7x:2x2x1
jax: 0.10.0
libtpu: 0.0.40
codegen_flags: <defaults>
</compile_context>

<pallas_src>
import jax
import jax.numpy as jnp
from jax import lax
from jax.experimental import pallas as pl
from jax.experimental.pallas import tpu as pltpu

NUM_CLASSES = 21
THRESHOLD = 0.5
NEGPOS_RATIO = 3
VAR0, VAR1 = 0.1, 0.2
N_BISECT = 32          # bisection steps for the hard-negative ce threshold


def _smooth_l1(d):
    ad = jnp.abs(d)
    return jnp.where(ad < 1.0, 0.5 * d * d, ad - 0.5)


def _image_loss(tgt_rows, tgt_cols, priors, loc_d, conf_d):
    """Per-image SSD loss pieces; everything keeps P on the lane axis.

    tgt_rows (T,5), tgt_cols (5,T), priors (4,P), loc_d (4,P), conf_d (C,P).
    Returns (loss_l, loss_c, num_pos), each shaped (1, 1).
    """
    T = tgt_rows.shape[0]
    P = priors.shape[1]
    C = conf_d.shape[0]

    tx1 = tgt_rows[:, 0:1]      # (T, 1)
    ty1 = tgt_rows[:, 1:2]
    tx2 = tgt_rows[:, 2:3]
    ty2 = tgt_rows[:, 3:4]

    pcx = priors[0:1, :]        # (1, P)
    pcy = priors[1:2, :]
    pw = priors[2:3, :]
    ph = priors[3:4, :]
    px1 = pcx - 0.5 * pw
    py1 = pcy - 0.5 * ph
    px2 = pcx + 0.5 * pw
    py2 = pcy + 0.5 * ph

    # ---- jaccard overlaps, gt x priors: (T, P) ----
    iw = jnp.maximum(jnp.minimum(px2, tx2) - jnp.maximum(px1, tx1), 0.0)
    ih = jnp.maximum(jnp.minimum(py2, ty2) - jnp.maximum(py1, ty1), 0.0)
    inter = iw * ih
    area_p = (px2 - px1) * (py2 - py1)           # (1, P)
    area_t = (tx2 - tx1) * (ty2 - ty1)           # (T, 1)
    overlaps = inter * pl.reciprocal(area_p + area_t - inter, approx=True)

    t_iota = lax.broadcasted_iota(jnp.int32, (T, P), 0)
    p_iota = lax.broadcasted_iota(jnp.int32, (T, P), 1)

    # best prior for each ground-truth box (lane reduce)
    best_prior_ov = jnp.max(overlaps, axis=1, keepdims=True)                       # (T, 1)
    best_prior_idx = jnp.min(
        jnp.where(overlaps == best_prior_ov, p_iota, P), axis=1, keepdims=True)    # (T, 1)

    # best ground-truth box for each prior (sublane reduce over the tiny T axis)
    best_truth_ov = jnp.max(overlaps, axis=0, keepdims=True)                       # (1, P)
    best_truth_idx = jnp.min(
        jnp.where(overlaps == best_truth_ov, t_iota, T), axis=0, keepdims=True)    # (1, P)

    # force: every gt keeps its best prior (index_fill_ with 2 + the j-loop)
    force_mask = p_iota == best_prior_idx                                          # (T, P)
    forced = jnp.max(force_mask.astype(jnp.int32), axis=0, keepdims=True) > 0      # (1, P)
    forced_tidx = jnp.max(jnp.where(force_mask, t_iota, -1), axis=0, keepdims=True)
    best_truth_ov = jnp.where(forced, 2.0, best_truth_ov)
    best_truth_idx = jnp.where(forced, forced_tidx, best_truth_idx)

    # gather matched gt boxes / labels: one-hot over T, contracted on the MXU
    onehot_t = (t_iota == best_truth_idx).astype(jnp.float32)                      # (T, P)
    matched = jnp.dot(tgt_cols, onehot_t, preferred_element_type=jnp.float32)      # (5, P)
    mx1, my1 = matched[0:1, :], matched[1:2, :]
    mx2, my2 = matched[2:3, :], matched[3:4, :]
    mlab = matched[4:5, :]

    conf_tgt = jnp.where(best_truth_ov < THRESHOLD, 0.0, mlab + 1.0)               # (1, P)
    pos = conf_tgt > 0.0
    posf = pos.astype(jnp.float32)
    num_pos = jnp.sum(posf, axis=1, keepdims=True)                                 # (1, 1)

    # encode matched boxes w.r.t. priors (variances 0.1 / 0.2).  Negatives get a
    # harmless (pw, ph) box so log() never sees 0 (a NaN would survive * posf).
    g_cx = ((mx1 + mx2) * 0.5 - pcx) / (VAR0 * pw)
    g_cy = ((my1 + my2) * 0.5 - pcy) / (VAR0 * ph)
    bw = jnp.where(pos, mx2 - mx1, pw)
    bh = jnp.where(pos, my2 - my1, ph)
    g_w = jnp.log(bw / pw) / VAR1
    g_h = jnp.log(bh / ph) / VAR1

    # localization loss: smooth-L1, summed over positive priors
    sl1 = (_smooth_l1(loc_d[0:1, :] - g_cx) + _smooth_l1(loc_d[1:2, :] - g_cy)
           + _smooth_l1(loc_d[2:3, :] - g_w) + _smooth_l1(loc_d[3:4, :] - g_h))    # (1, P)
    loss_l = jnp.sum(sl1 * posf, axis=1, keepdims=True)                            # (1, 1)

    # per-prior cross-entropy: logsumexp_c(conf) - conf[target]
    cmax = jnp.max(conf_d, axis=0, keepdims=True)                                  # (1, P)
    lse = jnp.log(jnp.sum(jnp.exp(conf_d - cmax), axis=0, keepdims=True)) + cmax   # (1, P)
    c_iota = lax.broadcasted_iota(jnp.int32, (C, P), 0)
    onehot_c = (c_iota == conf_tgt.astype(jnp.int32)).astype(jnp.float32)          # (C, P)
    tgt_score = jnp.sum(conf_d * onehot_c, axis=0, keepdims=True)                  # (1, P)
    ce = lse - tgt_score                                                           # (1, P)

    # hard-negative mining.  torch ranks negatives by ce (positives zeroed) via a
    # double sort and keeps the top num_neg; the ce threshold of that top-k set is
    # found here by bisection (O(N_BISECT * P), VMEM-flat — replaces the O(P^2)
    # pairwise rank).  Positives are pushed below any threshold; ties among them
    # never matter because the final selection is pos | neg.
    negce = jnp.where(pos, -1.0, ce)                                               # (1, P)
    num_neg = jnp.minimum(NEGPOS_RATIO * num_pos, float(P - 1))                    # (1, 1)
    lo0 = jnp.zeros((1, 1), jnp.float32)
    hi0 = jnp.max(ce, axis=1, keepdims=True) + 1.0                                 # (1, 1)

    def bisect(_, carry):
        lo, hi = carry
        mid = 0.5 * (lo + hi)
        cnt = jnp.sum((negce >= mid).astype(jnp.float32), axis=1, keepdims=True)
        take = cnt >= num_neg
        return jnp.where(take, mid, lo), jnp.where(take, hi, mid)

    lo, _ = lax.fori_loop(0, N_BISECT, bisect, (lo0, hi0))
    neg = negce >= lo                                                              # (1, P)

    sel = jnp.logical_or(pos, neg).astype(jnp.float32)
    loss_c = jnp.sum(ce * sel, axis=1, keepdims=True)                              # (1, 1)
    return loss_l, loss_c, num_pos


def multibox_loss_kernel(tgt_rows_ref, tgt_cols_ref, prior_ref, loc_ref,
                         conf_ref, out_ref):
    bb = tgt_rows_ref.shape[0]
    priors = prior_ref[...]                      # (4, P)

    loss_l = jnp.zeros((1, 1), jnp.float32)
    loss_c = jnp.zeros((1, 1), jnp.float32)
    npos = jnp.zeros((1, 1), jnp.float32)
    # BB images per grid step amortize the per-step overhead; BB is small, so a
    # static unrolled loop keeps all the math 2-D and lane-dense.
    for i in range(bb):
        ll, lc, np_ = _image_loss(tgt_rows_ref[i], tgt_cols_ref[i], priors,
                                  loc_ref[i], conf_ref[i])
        loss_l = loss_l + ll
        loss_c = loss_c + lc
        npos = npos + np_

    # per-block partials in lanes 0, 1, 2 of an (8, 128)-aligned output tile
    lidx = lax.broadcasted_iota(jnp.int32, (8, 128), 1)
    out_ref[0] = (jnp.where(lidx == 0, loss_l, 0.0)
                  + jnp.where(lidx == 1, loss_c, 0.0)
                  + jnp.where(lidx == 2, npos, 0.0))


def multibox_loss(loc_data, conf_data, priors, targets, *, images_per_step=2):
    """loc_data (B,P,4), conf_data (B,P,C), priors (P,4) center-size,
    targets (B,T,5) rows = (x1, y1, x2, y2, label)."""
    B, P, _ = loc_data.shape
    C = conf_data.shape[-1]
    T = targets.shape[1]

    bb = max(1, min(images_per_step, B))
    while B % bb:                     # keep BB a divisor of B at these toy sizes
        bb -= 1
    nb = B // bb

    tgt_rows = targets.astype(jnp.float32)                            # (B, T, 5)
    tgt_cols = jnp.transpose(tgt_rows, (0, 2, 1))                     # (B, 5, T)
    priors_t = jnp.transpose(priors.astype(jnp.float32), (1, 0))      # (4, P)
    loc_t = jnp.transpose(loc_data.astype(jnp.float32), (0, 2, 1))    # (B, 4, P)
    conf_t = jnp.transpose(conf_data.astype(jnp.float32), (0, 2, 1))  # (B, C, P)

    out = pl.pallas_call(
        multibox_loss_kernel,
        out_shape=jax.ShapeDtypeStruct((nb, 8, 128), jnp.float32),
        grid_spec=pltpu.PrefetchScalarGridSpec(
            num_scalar_prefetch=0,
            grid=(nb,),
            in_specs=[
                pl.BlockSpec((bb, T, 5), lambda b: (b, 0, 0)),
                pl.BlockSpec((bb, 5, T), lambda b: (b, 0, 0)),
                pl.BlockSpec((4, P), lambda b: (0, 0)),
                pl.BlockSpec((bb, 4, P), lambda b: (b, 0, 0)),
                pl.BlockSpec((bb, C, P), lambda b: (b, 0, 0)),
            ],
            out_specs=pl.BlockSpec((1, 8, 128), lambda b: (b, 0, 0)),
        ),
        compiler_params=pltpu.CompilerParams(
            dimension_semantics=("parallel",),
            vmem_limit_bytes=32 * 1024 * 1024,
        ),
    )(tgt_rows, tgt_cols, priors_t, loc_t, conf_t)

    partial = out[:, 0, :3]                        # (nb, 3): loss_l, loss_c, num_pos
    totals = jnp.sum(partial, axis=0)
    n = jnp.maximum(totals[2], 1.0)                # guard: zero positives -> no NaN
    return totals[0] / n, totals[1] / n


if __name__ == "__main__":
    key = jax.random.PRNGKey(0)
    B, P, C, T = 4, 128, NUM_CLASSES, 4
    k = jax.random.split(key, 7)

    # predictions (synthetic, deterministic)
    loc_data = 0.1 * jax.random.normal(k[0], (B, P, 4), jnp.float32)
    conf_data = jax.random.normal(k[1], (B, P, C), jnp.float32)

    # priors in center-size form
    pcxy = jax.random.uniform(k[2], (P, 2), jnp.float32, 0.1, 0.9)
    pwh = jax.random.uniform(k[3], (P, 2), jnp.float32, 0.1, 0.4)
    priors = jnp.concatenate([pcxy, pwh], axis=1)

    # ground-truth targets: (x1, y1, x2, y2, label) per object, T objects / image
    c1 = jax.random.uniform(k[4], (B, T, 2), jnp.float32, 0.05, 0.55)
    wh = jax.random.uniform(k[5], (B, T, 2), jnp.float32, 0.1, 0.35)
    c2 = c1 + wh
    labels = jax.random.randint(k[6], (B, T, 1), 0, C - 1).astype(jnp.float32)
    targets = jnp.concatenate([c1, c2, labels], axis=-1)

    loss_l, loss_c = multibox_loss(loc_data, conf_data, priors, targets)
    jax.block_until_ready((loss_l, loss_c))
    assert bool(jnp.isfinite(loss_l)) and bool(jnp.isfinite(loss_c))
    print("KERNEL_OK")
</pallas_src>

<mosaic_0001>
module attributes {stable_mosaic.version = 11 : i64} {
  func.func @multibox_loss_kernel(%arg0: i32, %arg1: memref<2x4x5xf32, #tpu.memory_space<vmem>>, %arg2: memref<2x5x4xf32, #tpu.memory_space<vmem>>, %arg3: memref<4x128xf32, #tpu.memory_space<vmem>>, %arg4: memref<2x4x128xf32, #tpu.memory_space<vmem>>, %arg5: memref<2x21x128xf32, #tpu.memory_space<vmem>>, %arg6: memref<1x8x128xf32, #tpu.memory_space<vmem>>) attributes {dimension_semantics = [#tpu.dimension_semantics<parallel>], iteration_bounds = array<i64: 2>, scalar_prefetch = 0 : i64, scratch_operands = 0 : i64, tpu.core_type = #tpu.core_type<tc>, window_params = [{transform_indices = @transform_0, window_bounds = array<i64: 2, 4, 5>}, {transform_indices = @transform_1, window_bounds = array<i64: 2, 5, 4>}, {pipeline_mode = #tpu.pipeline_mode<synchronous>, transform_indices = @transform_2, window_bounds = array<i64: 4, 128>}, {transform_indices = @transform_3, window_bounds = array<i64: 2, 4, 128>}, {transform_indices = @transform_4, window_bounds = array<i64: 2, 21, 128>}, {transform_indices = @transform_5, window_bounds = array<i64: 1, 8, 128>}]} {
    %c0 = arith.constant 0 : index
    %c0_0 = arith.constant 0 : index
    %0 = vector.load %arg3[%c0, %c0_0] : memref<4x128xf32, #tpu.memory_space<vmem>>, vector<4x128xf32>
    %cst = arith.constant 0.000000e+00 : f32
    %1 = vector.broadcast %cst : f32 to vector<1x1xf32>
    %cst_1 = arith.constant 0.000000e+00 : f32
    %2 = vector.broadcast %cst_1 : f32 to vector<1x1xf32>
    %cst_2 = arith.constant 0.000000e+00 : f32
    %3 = vector.broadcast %cst_2 : f32 to vector<1x1xf32>
    %c0_3 = arith.constant 0 : index
    %c0_4 = arith.constant 0 : index
    %c0_5 = arith.constant 0 : index
    %4 = vector.load %arg1[%c0_3, %c0_4, %c0_5] : memref<2x4x5xf32, #tpu.memory_space<vmem>>, vector<1x4x5xf32>
    %5 = vector.shape_cast %4 : vector<1x4x5xf32> to vector<4x5xf32>
    %c0_6 = arith.constant 0 : index
    %c0_7 = arith.constant 0 : index
    %c0_8 = arith.constant 0 : index
    %6 = vector.load %arg2[%c0_6, %c0_7, %c0_8] : memref<2x5x4xf32, #tpu.memory_space<vmem>>, vector<1x5x4xf32>
    %7 = vector.shape_cast %6 : vector<1x5x4xf32> to vector<5x4xf32>
    %c0_9 = arith.constant 0 : index
    %c0_10 = arith.constant 0 : index
    %c0_11 = arith.constant 0 : index
    %8 = vector.load %arg4[%c0_9, %c0_10, %c0_11] : memref<2x4x128xf32, #tpu.memory_space<vmem>>, vector<1x4x128xf32>
    %9 = vector.shape_cast %8 : vector<1x4x128xf32> to vector<4x128xf32>
    %c0_12 = arith.constant 0 : index
    %c0_13 = arith.constant 0 : index
    %c0_14 = arith.constant 0 : index
    %10 = vector.load %arg5[%c0_12, %c0_13, %c0_14] : memref<2x21x128xf32, #tpu.memory_space<vmem>>, vector<1x21x128xf32>
    %11 = vector.shape_cast %10 : vector<1x21x128xf32> to vector<21x128xf32>
    %12 = vector.extract_strided_slice %5 {offsets = [0, 0], sizes = [4, 1], strides = [1, 1]} : vector<4x5xf32> to vector<4x1xf32>
    %13 = vector.extract_strided_slice %5 {offsets = [0, 1], sizes = [4, 1], strides = [1, 1]} : vector<4x5xf32> to vector<4x1xf32>
    %14 = vector.extract_strided_slice %5 {offsets = [0, 2], sizes = [4, 1], strides = [1, 1]} : vector<4x5xf32> to vector<4x1xf32>
    %15 = vector.extract_strided_slice %5 {offsets = [0, 3], sizes = [4, 1], strides = [1, 1]} : vector<4x5xf32> to vector<4x1xf32>
    %16 = vector.extract_strided_slice %0 {offsets = [0, 0], sizes = [1, 128], strides = [1, 1]} : vector<4x128xf32> to vector<1x128xf32>
    %17 = vector.extract_strided_slice %0 {offsets = [1, 0], sizes = [1, 128], strides = [1, 1]} : vector<4x128xf32> to vector<1x128xf32>
    %18 = vector.extract_strided_slice %0 {offsets = [2, 0], sizes = [1, 128], strides = [1, 1]} : vector<4x128xf32> to vector<1x128xf32>
    %19 = vector.extract_strided_slice %0 {offsets = [3, 0], sizes = [1, 128], strides = [1, 1]} : vector<4x128xf32> to vector<1x128xf32>
    %cst_15 = arith.constant 5.000000e-01 : f32
    %20 = vector.broadcast %cst_15 : f32 to vector<1x128xf32>
    %21 = arith.mulf %20, %18 : vector<1x128xf32>
    %22 = arith.subf %16, %21 : vector<1x128xf32>
    %cst_16 = arith.constant 5.000000e-01 : f32
    %23 = vector.broadcast %cst_16 : f32 to vector<1x128xf32>
    %24 = arith.mulf %23, %19 : vector<1x128xf32>
    %25 = arith.subf %17, %24 : vector<1x128xf32>
    %cst_17 = arith.constant 5.000000e-01 : f32
    %26 = vector.broadcast %cst_17 : f32 to vector<1x128xf32>
    %27 = arith.mulf %26, %18 : vector<1x128xf32>
    %28 = arith.addf %16, %27 : vector<1x128xf32>
    %cst_18 = arith.constant 5.000000e-01 : f32
    %29 = vector.broadcast %cst_18 : f32 to vector<1x128xf32>
    %30 = arith.mulf %29, %19 : vector<1x128xf32>
    %31 = arith.addf %17, %30 : vector<1x128xf32>
    %32 = vector.broadcast %28 : vector<1x128xf32> to vector<4x128xf32>
    %33 = vector.broadcast %14 : vector<4x1xf32> to vector<4x128xf32>
    %34 = arith.minimumf %32, %33 : vector<4x128xf32>
    %35 = vector.broadcast %22 : vector<1x128xf32> to vector<4x128xf32>
    %36 = vector.broadcast %12 : vector<4x1xf32> to vector<4x128xf32>
    %37 = arith.maximumf %35, %36 : vector<4x128xf32>
    %38 = arith.subf %34, %37 : vector<4x128xf32>
    %cst_19 = arith.constant 0.000000e+00 : f32
    %39 = vector.broadcast %cst_19 : f32 to vector<4x128xf32>
    %40 = arith.maximumf %38, %39 : vector<4x128xf32>
    %41 = vector.broadcast %31 : vector<1x128xf32> to vector<4x128xf32>
    %42 = vector.broadcast %15 : vector<4x1xf32> to vector<4x128xf32>
    %43 = arith.minimumf %41, %42 : vector<4x128xf32>
    %44 = vector.broadcast %25 : vector<1x128xf32> to vector<4x128xf32>
    %45 = vector.broadcast %13 : vector<4x1xf32> to vector<4x128xf32>
    %46 = arith.maximumf %44, %45 : vector<4x128xf32>
    %47 = arith.subf %43, %46 : vector<4x128xf32>
    %cst_20 = arith.constant 0.000000e+00 : f32
    %48 = vector.broadcast %cst_20 : f32 to vector<4x128xf32>
    %49 = arith.maximumf %47, %48 : vector<4x128xf32>
    %50 = arith.mulf %40, %49 : vector<4x128xf32>
    %51 = arith.subf %28, %22 : vector<1x128xf32>
    %52 = arith.subf %31, %25 : vector<1x128xf32>
    %53 = arith.mulf %51, %52 : vector<1x128xf32>
    %54 = arith.subf %14, %12 : vector<4x1xf32>
    %55 = arith.subf %15, %13 : vector<4x1xf32>
    %56 = arith.mulf %54, %55 : vector<4x1xf32>
    %57 = vector.broadcast %53 : vector<1x128xf32> to vector<4x128xf32>
    %58 = vector.broadcast %56 : vector<4x1xf32> to vector<4x128xf32>
    %59 = arith.addf %57, %58 : vector<4x128xf32>
    %60 = arith.subf %59, %50 : vector<4x128xf32>
    %61 = tpu.reciprocal %60 {approx = true} : vector<4x128xf32> -> vector<4x128xf32>
    %62 = arith.mulf %50, %61 : vector<4x128xf32>
    %63 = tpu.iota {dimensions = array<i32: 0>} : vector<4x128xi32>
    %64 = tpu.iota {dimensions = array<i32: 1>} : vector<4x128xi32>
    %cst_21 = arith.constant dense<0xFF800000> : vector<4xf32>
    %65 = vector.multi_reduction <maximumf>, %62, %cst_21 [1] : vector<4x128xf32> to vector<4xf32>
    %66 = vector.shape_cast %65 : vector<4xf32> to vector<4x1xf32>
    %67 = vector.broadcast %66 : vector<4x1xf32> to vector<4x128xf32>
    %68 = arith.cmpf oeq, %62, %67 : vector<4x128xf32>
    %c128_i32 = arith.constant 128 : i32
    %69 = vector.broadcast %c128_i32 : i32 to vector<4x128xi32>
    %70 = arith.select %68, %64, %69 : vector<4x128xi1>, vector<4x128xi32>
    %cst_22 = arith.constant dense<2147483647> : vector<4xi32>
    %71 = vector.multi_reduction <minsi>, %70, %cst_22 [1] : vector<4x128xi32> to vector<4xi32>
    %72 = vector.shape_cast %71 : vector<4xi32> to vector<4x1xi32>
    %cst_23 = arith.constant dense<0xFF800000> : vector<128xf32>
    %73 = vector.multi_reduction <maximumf>, %62, %cst_23 [0] : vector<4x128xf32> to vector<128xf32>
    %74 = vector.shape_cast %73 : vector<128xf32> to vector<1x128xf32>
    %75 = vector.broadcast %74 : vector<1x128xf32> to vector<4x128xf32>
    %76 = arith.cmpf oeq, %62, %75 : vector<4x128xf32>
    %c4_i32 = arith.constant 4 : i32
    %77 = vector.broadcast %c4_i32 : i32 to vector<4x128xi32>
    %78 = arith.select %76, %63, %77 : vector<4x128xi1>, vector<4x128xi32>
    %cst_24 = arith.constant dense<2147483647> : vector<128xi32>
    %79 = vector.multi_reduction <minsi>, %78, %cst_24 [0] : vector<4x128xi32> to vector<128xi32>
    %80 = vector.shape_cast %79 : vector<128xi32> to vector<1x128xi32>
    %81 = vector.broadcast %72 : vector<4x1xi32> to vector<4x128xi32>
    %82 = arith.cmpi eq, %64, %81 : vector<4x128xi32>
    %83 = arith.extui %82 : vector<4x128xi1> to vector<4x128xi32>
    %cst_25 = arith.constant dense<-2147483648> : vector<128xi32>
    %84 = vector.multi_reduction <maxsi>, %83, %cst_25 [0] : vector<4x128xi32> to vector<128xi32>
    %85 = vector.shape_cast %84 : vector<128xi32> to vector<1x128xi32>
    %c0_i32 = arith.constant 0 : i32
    %86 = vector.broadcast %c0_i32 : i32 to vector<1x128xi32>
    %87 = arith.cmpi sgt, %85, %86 : vector<1x128xi32>
    %c-1_i32 = arith.constant -1 : i32
    %88 = vector.broadcast %c-1_i32 : i32 to vector<4x128xi32>
    %89 = arith.select %82, %63, %88 : vector<4x128xi1>, vector<4x128xi32>
    %cst_26 = arith.constant dense<-2147483648> : vector<128xi32>
    %90 = vector.multi_reduction <maxsi>, %89, %cst_26 [0] : vector<4x128xi32> to vector<128xi32>
    %91 = vector.shape_cast %90 : vector<128xi32> to vector<1x128xi32>
    %cst_27 = arith.constant 2.000000e+00 : f32
    %92 = vector.broadcast %cst_27 : f32 to vector<1x128xf32>
    %93 = arith.select %87, %92, %74 : vector<1x128xi1>, vector<1x128xf32>
    %94 = arith.select %87, %91, %80 : vector<1x128xi1>, vector<1x128xi32>
    %95 = vector.broadcast %94 : vector<1x128xi32> to vector<4x128xi32>
    %96 = arith.cmpi eq, %63, %95 : vector<4x128xi32>
    %97 = arith.extui %96 : vector<4x128xi1> to vector<4x128xi32>
    %98 = arith.sitofp %97 : vector<4x128xi32> to vector<4x128xf32>
    %cst_28 = arith.constant dense<0.000000e+00> : vector<5x128xf32>
    %99 = tpu.matmul %7, %98, %cst_28 {dimension_numbers = #tpu.dot_dimension_numbers<[1], [0], [0], [1], [0, 0, 1, 1], [], []>} : vector<5x4xf32>, vector<4x128xf32>, vector<5x128xf32> -> vector<5x128xf32>
    %100 = vector.extract_strided_slice %99 {offsets = [0, 0], sizes = [1, 128], strides = [1, 1]} : vector<5x128xf32> to vector<1x128xf32>
    %101 = vector.extract_strided_slice %99 {offsets = [1, 0], sizes = [1, 128], strides = [1, 1]} : vector<5x128xf32> to vector<1x128xf32>
    %102 = vector.extract_strided_slice %99 {offsets = [2, 0], sizes = [1, 128], strides = [1, 1]} : vector<5x128xf32> to vector<1x128xf32>
    %103 = vector.extract_strided_slice %99 {offsets = [3, 0], sizes = [1, 128], strides = [1, 1]} : vector<5x128xf32> to vector<1x128xf32>
    %104 = vector.extract_strided_slice %99 {offsets = [4, 0], sizes = [1, 128], strides = [1, 1]} : vector<5x128xf32> to vector<1x128xf32>
    %cst_29 = arith.constant 5.000000e-01 : f32
    %105 = vector.broadcast %cst_29 : f32 to vector<1x128xf32>
    %106 = arith.cmpf olt, %93, %105 : vector<1x128xf32>
    %cst_30 = arith.constant 1.000000e+00 : f32
    %107 = vector.broadcast %cst_30 : f32 to vector<1x128xf32>
    %108 = arith.addf %104, %107 : vector<1x128xf32>
    %cst_31 = arith.constant 0.000000e+00 : f32
    %109 = vector.broadcast %cst_31 : f32 to vector<1x128xf32>
    %110 = arith.select %106, %109, %108 : vector<1x128xi1>, vector<1x128xf32>
    %cst_32 = arith.constant 0.000000e+00 : f32
    %111 = vector.broadcast %cst_32 : f32 to vector<1x128xf32>
    %112 = arith.cmpf ogt, %110, %111 : vector<1x128xf32>
    %113 = arith.extui %112 : vector<1x128xi1> to vector<1x128xi32>
    %114 = arith.sitofp %113 : vector<1x128xi32> to vector<1x128xf32>
    %cst_33 = arith.constant dense<0.000000e+00> : vector<1xf32>
    %115 = vector.multi_reduction <add>, %114, %cst_33 [1] : vector<1x128xf32> to vector<1xf32>
    %116 = vector.shape_cast %115 : vector<1xf32> to vector<1x1xf32>
    %117 = arith.addf %100, %102 : vector<1x128xf32>
    %cst_34 = arith.constant 5.000000e-01 : f32
    %118 = vector.broadcast %cst_34 : f32 to vector<1x128xf32>
    %119 = arith.mulf %117, %118 : vector<1x128xf32>
    %120 = arith.subf %119, %16 : vector<1x128xf32>
    %cst_35 = arith.constant 1.000000e-01 : f32
    %121 = vector.broadcast %cst_35 : f32 to vector<1x128xf32>
    %122 = arith.mulf %121, %18 : vector<1x128xf32>
    %123 = arith.divf %120, %122 : vector<1x128xf32>
    %124 = arith.addf %101, %103 : vector<1x128xf32>
    %cst_36 = arith.constant 5.000000e-01 : f32
    %125 = vector.broadcast %cst_36 : f32 to vector<1x128xf32>
    %126 = arith.mulf %124, %125 : vector<1x128xf32>
    %127 = arith.subf %126, %17 : vector<1x128xf32>
    %cst_37 = arith.constant 1.000000e-01 : f32
    %128 = vector.broadcast %cst_37 : f32 to vector<1x128xf32>
    %129 = arith.mulf %128, %19 : vector<1x128xf32>
    %130 = arith.divf %127, %129 : vector<1x128xf32>
    %131 = arith.subf %102, %100 : vector<1x128xf32>
    %132 = arith.select %112, %131, %18 : vector<1x128xi1>, vector<1x128xf32>
    %133 = arith.subf %103, %101 : vector<1x128xf32>
    %134 = arith.select %112, %133, %19 : vector<1x128xi1>, vector<1x128xf32>
    %135 = arith.divf %132, %18 : vector<1x128xf32>
    %136 = math.log %135 : vector<1x128xf32>
    %cst_38 = arith.constant 2.000000e-01 : f32
    %137 = vector.broadcast %cst_38 : f32 to vector<1x128xf32>
    %138 = arith.divf %136, %137 : vector<1x128xf32>
    %139 = arith.divf %134, %19 : vector<1x128xf32>
    %140 = math.log %139 : vector<1x128xf32>
    %cst_39 = arith.constant 2.000000e-01 : f32
    %141 = vector.broadcast %cst_39 : f32 to vector<1x128xf32>
    %142 = arith.divf %140, %141 : vector<1x128xf32>
    %143 = vector.extract_strided_slice %9 {offsets = [0, 0], sizes = [1, 128], strides = [1, 1]} : vector<4x128xf32> to vector<1x128xf32>
    %144 = arith.subf %143, %123 : vector<1x128xf32>
    %145 = math.absf %144 : vector<1x128xf32>
    %cst_40 = arith.constant 1.000000e+00 : f32
    %146 = vector.broadcast %cst_40 : f32 to vector<1x128xf32>
    %147 = arith.cmpf olt, %145, %146 : vector<1x128xf32>
    %cst_41 = arith.constant 5.000000e-01 : f32
    %148 = vector.broadcast %cst_41 : f32 to vector<1x128xf32>
    %149 = arith.mulf %148, %144 : vector<1x128xf32>
    %150 = arith.mulf %149, %144 : vector<1x128xf32>
    %cst_42 = arith.constant 5.000000e-01 : f32
    %151 = vector.broadcast %cst_42 : f32 to vector<1x128xf32>
    %152 = arith.subf %145, %151 : vector<1x128xf32>
    %153 = arith.select %147, %150, %152 : vector<1x128xi1>, vector<1x128xf32>
    %154 = vector.extract_strided_slice %9 {offsets = [1, 0], sizes = [1, 128], strides = [1, 1]} : vector<4x128xf32> to vector<1x128xf32>
    %155 = arith.subf %154, %130 : vector<1x128xf32>
    %156 = math.absf %155 : vector<1x128xf32>
    %cst_43 = arith.constant 1.000000e+00 : f32
    %157 = vector.broadcast %cst_43 : f32 to vector<1x128xf32>
    %158 = arith.cmpf olt, %156, %157 : vector<1x128xf32>
    %cst_44 = arith.constant 5.000000e-01 : f32
    %159 = vector.broadcast %cst_44 : f32 to vector<1x128xf32>
    %160 = arith.mulf %159, %155 : vector<1x128xf32>
    %161 = arith.mulf %160, %155 : vector<1x128xf32>
    %cst_45 = arith.constant 5.000000e-01 : f32
    %162 = vector.broadcast %cst_45 : f32 to vector<1x128xf32>
    %163 = arith.subf %156, %162 : vector<1x128xf32>
    %164 = arith.select %158, %161, %163 : vector<1x128xi1>, vector<1x128xf32>
    %165 = arith.addf %153, %164 : vector<1x128xf32>
    %166 = vector.extract_strided_slice %9 {offsets = [2, 0], sizes = [1, 128], strides = [1, 1]} : vector<4x128xf32> to vector<1x128xf32>
    %167 = arith.subf %166, %138 : vector<1x128xf32>
    %168 = math.absf %167 : vector<1x128xf32>
    %cst_46 = arith.constant 1.000000e+00 : f32
    %169 = vector.broadcast %cst_46 : f32 to vector<1x128xf32>
    %170 = arith.cmpf olt, %168, %169 : vector<1x128xf32>
    %cst_47 = arith.constant 5.000000e-01 : f32
    %171 = vector.broadcast %cst_47 : f32 to vector<1x128xf32>
    %172 = arith.mulf %171, %167 : vector<1x128xf32>
    %173 = arith.mulf %172, %167 : vector<1x128xf32>
    %cst_48 = arith.constant 5.000000e-01 : f32
    %174 = vector.broadcast %cst_48 : f32 to vector<1x128xf32>
    %175 = arith.subf %168, %174 : vector<1x128xf32>
    %176 = arith.select %170, %173, %175 : vector<1x128xi1>, vector<1x128xf32>
    %177 = arith.addf %165, %176 : vector<1x128xf32>
    %178 = vector.extract_strided_slice %9 {offsets = [3, 0], sizes = [1, 128], strides = [1, 1]} : vector<4x128xf32> to vector<1x128xf32>
    %179 = arith.subf %178, %142 : vector<1x128xf32>
    %180 = math.absf %179 : vector<1x128xf32>
    %cst_49 = arith.constant 1.000000e+00 : f32
    %181 = vector.broadcast %cst_49 : f32 to vector<1x128xf32>
    %182 = arith.cmpf olt, %180, %181 : vector<1x128xf32>
    %cst_50 = arith.constant 5.000000e-01 : f32
    %183 = vector.broadcast %cst_50 : f32 to vector<1x128xf32>
    %184 = arith.mulf %183, %179 : vector<1x128xf32>
    %185 = arith.mulf %184, %179 : vector<1x128xf32>
    %cst_51 = arith.constant 5.000000e-01 : f32
    %186 = vector.broadcast %cst_51 : f32 to vector<1x128xf32>
    %187 = arith.subf %180, %186 : vector<1x128xf32>
    %188 = arith.select %182, %185, %187 : vector<1x128xi1>, vector<1x128xf32>
    %189 = arith.addf %177, %188 : vector<1x128xf32>
    %190 = arith.mulf %189, %114 : vector<1x128xf32>
    %cst_52 = arith.constant dense<0.000000e+00> : vector<1xf32>
    %191 = vector.multi_reduction <add>, %190, %cst_52 [1] : vector<1x128xf32> to vector<1xf32>
    %192 = vector.shape_cast %191 : vector<1xf32> to vector<1x1xf32>
    %cst_53 = arith.constant dense<0xFF800000> : vector<128xf32>
    %193 = vector.multi_reduction <maximumf>, %11, %cst_53 [0] : vector<21x128xf32> to vector<128xf32>
    %194 = vector.shape_cast %193 : vector<128xf32> to vector<1x128xf32>
    %195 = vector.broadcast %194 : vector<1x128xf32> to vector<21x128xf32>
    %196 = arith.subf %11, %195 : vector<21x128xf32>
    %197 = math.exp %196 : vector<21x128xf32>
    %cst_54 = arith.constant dense<0.000000e+00> : vector<128xf32>
    %198 = vector.multi_reduction <add>, %197, %cst_54 [0] : vector<21x128xf32> to vector<128xf32>
    %199 = vector.shape_cast %198 : vector<128xf32> to vector<1x128xf32>
    %200 = math.log %199 : vector<1x128xf32>
    %201 = arith.addf %200, %194 : vector<1x128xf32>
    %202 = tpu.iota {dimensions = array<i32: 0>} : vector<21x128xi32>
    %203 = arith.fptosi %110 : vector<1x128xf32> to vector<1x128xi32>
    %204 = vector.broadcast %203 : vector<1x128xi32> to vector<21x128xi32>
    %205 = arith.cmpi eq, %202, %204 : vector<21x128xi32>
    %206 = arith.extui %205 : vector<21x128xi1> to vector<21x128xi32>
    %207 = arith.sitofp %206 : vector<21x128xi32> to vector<21x128xf32>
    %208 = arith.mulf %11, %207 : vector<21x128xf32>
    %cst_55 = arith.constant dense<0.000000e+00> : vector<128xf32>
    %209 = vector.multi_reduction <add>, %208, %cst_55 [0] : vector<21x128xf32> to vector<128xf32>
    %210 = vector.shape_cast %209 : vector<128xf32> to vector<1x128xf32>
    %211 = arith.subf %201, %210 : vector<1x128xf32>
    %cst_56 = arith.constant -1.000000e+00 : f32
    %212 = vector.broadcast %cst_56 : f32 to vector<1x128xf32>
    %213 = arith.select %112, %212, %211 : vector<1x128xi1>, vector<1x128xf32>
    %cst_57 = arith.constant 3.000000e+00 : f32
    %214 = vector.broadcast %cst_57 : f32 to vector<1x1xf32>
    %215 = arith.mulf %214, %116 : vector<1x1xf32>
    %cst_58 = arith.constant 1.270000e+02 : f32
    %216 = vector.broadcast %cst_58 : f32 to vector<1x1xf32>
    %217 = arith.minimumf %215, %216 : vector<1x1xf32>
    %cst_59 = arith.constant 0.000000e+00 : f32
    %218 = vector.broadcast %cst_59 : f32 to vector<1x1xf32>
    %cst_60 = arith.constant dense<0xFF800000> : vector<1xf32>
    %219 = vector.multi_reduction <maximumf>, %211, %cst_60 [1] : vector<1x128xf32> to vector<1xf32>
    %220 = vector.shape_cast %219 : vector<1xf32> to vector<1x1xf32>
    %cst_61 = arith.constant 1.000000e+00 : f32
    %221 = vector.broadcast %cst_61 : f32 to vector<1x1xf32>
    %222 = arith.addf %220, %221 : vector<1x1xf32>
    %c0_i32_62 = arith.constant 0 : i32
    %c32_i32 = arith.constant 32 : i32
    %223 = arith.addi %c0_i32_62, %c32_i32 : i32
    %c1_i32 = arith.constant 1 : i32
    %224:2 = scf.for %arg7 = %c0_i32_62 to %223 step %c1_i32 iter_args(%arg8 = %218, %arg9 = %222) -> (vector<1x1xf32>, vector<1x1xf32>)  : i32 {
      %492 = arith.addf %arg8, %arg9 : vector<1x1xf32>
      %cst_138 = arith.constant 5.000000e-01 : f32
      %493 = vector.broadcast %cst_138 : f32 to vector<1x1xf32>
      %494 = arith.mulf %493, %492 : vector<1x1xf32>
      %495 = vector.broadcast %494 : vector<1x1xf32> to vector<1x128xf32>
      %496 = arith.cmpf oge, %213, %495 : vector<1x128xf32>
      %497 = arith.extui %496 : vector<1x128xi1> to vector<1x128xi32>
      %498 = arith.sitofp %497 : vector<1x128xi32> to vector<1x128xf32>
      %cst_139 = arith.constant dense<0.000000e+00> : vector<1xf32>
      %499 = vector.multi_reduction <add>, %498, %cst_139 [1] : vector<1x128xf32> to vector<1xf32>
      %500 = vector.shape_cast %499 : vector<1xf32> to vector<1x1xf32>
      %501 = arith.cmpf oge, %500, %217 : vector<1x1xf32>
      %502 = arith.select %501, %494, %arg8 : vector<1x1xi1>, vector<1x1xf32>
      %503 = arith.select %501, %arg9, %494 : vector<1x1xi1>, vector<1x1xf32>
      scf.yield %502, %503 : vector<1x1xf32>, vector<1x1xf32>
    }
    %225 = vector.broadcast %224#0 : vector<1x1xf32> to vector<1x128xf32>
    %226 = arith.cmpf oge, %213, %225 : vector<1x128xf32>
    %227 = arith.ori %112, %226 : vector<1x128xi1>
    %228 = arith.extui %227 : vector<1x128xi1> to vector<1x128xi32>
    %229 = arith.sitofp %228 : vector<1x128xi32> to vector<1x128xf32>
    %230 = arith.mulf %211, %229 : vector<1x128xf32>
    %cst_63 = arith.constant dense<0.000000e+00> : vector<1xf32>
    %231 = vector.multi_reduction <add>, %230, %cst_63 [1] : vector<1x128xf32> to vector<1xf32>
    %232 = vector.shape_cast %231 : vector<1xf32> to vector<1x1xf32>
    %233 = arith.addf %1, %192 : vector<1x1xf32>
    %234 = arith.addf %2, %232 : vector<1x1xf32>
    %235 = arith.addf %3, %116 : vector<1x1xf32>
    %c1 = arith.constant 1 : index
    %c0_64 = arith.constant 0 : index
    %c0_65 = arith.constant 0 : index
    %236 = vector.load %arg1[%c1, %c0_64, %c0_65] : memref<2x4x5xf32, #tpu.memory_space<vmem>>, vector<1x4x5xf32>
    %237 = vector.shape_cast %236 : vector<1x4x5xf32> to vector<4x5xf32>
    %c1_66 = arith.constant 1 : index
    %c0_67 = arith.constant 0 : index
    %c0_68 = arith.constant 0 : index
    %238 = vector.load %arg2[%c1_66, %c0_67, %c0_68] : memref<2x5x4xf32, #tpu.memory_space<vmem>>, vector<1x5x4xf32>
    %239 = vector.shape_cast %238 : vector<1x5x4xf32> to vector<5x4xf32>
    %c1_69 = arith.constant 1 : index
    %c0_70 = arith.constant 0 : index
    %c0_71 = arith.constant 0 : index
    %240 = vector.load %arg4[%c1_69, %c0_70, %c0_71] : memref<2x4x128xf32, #tpu.memory_space<vmem>>, vector<1x4x128xf32>
    %241 = vector.shape_cast %240 : vector<1x4x128xf32> to vector<4x128xf32>
    %c1_72 = arith.constant 1 : index
    %c0_73 = arith.constant 0 : index
    %c0_74 = arith.constant 0 : index
    %242 = vector.load %arg5[%c1_72, %c0_73, %c0_74] : memref<2x21x128xf32, #tpu.memory_space<vmem>>, vector<1x21x128xf32>
    %243 = vector.shape_cast %242 : vector<1x21x128xf32> to vector<21x128xf32>
    %244 = vector.extract_strided_slice %237 {offsets = [0, 0], sizes = [4, 1], strides = [1, 1]} : vector<4x5xf32> to vector<4x1xf32>
    %245 = vector.extract_strided_slice %237 {offsets = [0, 1], sizes = [4, 1], strides = [1, 1]} : vector<4x5xf32> to vector<4x1xf32>
    %246 = vector.extract_strided_slice %237 {offsets = [0, 2], sizes = [4, 1], strides = [1, 1]} : vector<4x5xf32> to vector<4x1xf32>
    %247 = vector.extract_strided_slice %237 {offsets = [0, 3], sizes = [4, 1], strides = [1, 1]} : vector<4x5xf32> to vector<4x1xf32>
    %248 = vector.extract_strided_slice %0 {offsets = [0, 0], sizes = [1, 128], strides = [1, 1]} : vector<4x128xf32> to vector<1x128xf32>
    %249 = vector.extract_strided_slice %0 {offsets = [1, 0], sizes = [1, 128], strides = [1, 1]} : vector<4x128xf32> to vector<1x128xf32>
    %250 = vector.extract_strided_slice %0 {offsets = [2, 0], sizes = [1, 128], strides = [1, 1]} : vector<4x128xf32> to vector<1x128xf32>
    %251 = vector.extract_strided_slice %0 {offsets = [3, 0], sizes = [1, 128], strides = [1, 1]} : vector<4x128xf32> to vector<1x128xf32>
    %cst_75 = arith.constant 5.000000e-01 : f32
    %252 = vector.broadcast %cst_75 : f32 to vector<1x128xf32>
    %253 = arith.mulf %252, %250 : vector<1x128xf32>
    %254 = arith.subf %248, %253 : vector<1x128xf32>
    %cst_76 = arith.constant 5.000000e-01 : f32
    %255 = vector.broadcast %cst_76 : f32 to vector<1x128xf32>
    %256 = arith.mulf %255, %251 : vector<1x128xf32>
    %257 = arith.subf %249, %256 : vector<1x128xf32>
    %cst_77 = arith.constant 5.000000e-01 : f32
    %258 = vector.broadcast %cst_77 : f32 to vector<1x128xf32>
    %259 = arith.mulf %258, %250 : vector<1x128xf32>
    %260 = arith.addf %248, %259 : vector<1x128xf32>
    %cst_78 = arith.constant 5.000000e-01 : f32
    %261 = vector.broadcast %cst_78 : f32 to vector<1x128xf32>
    %262 = arith.mulf %261, %251 : vector<1x128xf32>
    %263 = arith.addf %249, %262 : vector<1x128xf32>
    %264 = vector.broadcast %260 : vector<1x128xf32> to vector<4x128xf32>
    %265 = vector.broadcast %246 : vector<4x1xf32> to vector<4x128xf32>
    %266 = arith.minimumf %264, %265 : vector<4x128xf32>
    %267 = vector.broadcast %254 : vector<1x128xf32> to vector<4x128xf32>
    %268 = vector.broadcast %244 : vector<4x1xf32> to vector<4x128xf32>
    %269 = arith.maximumf %267, %268 : vector<4x128xf32>
    %270 = arith.subf %266, %269 : vector<4x128xf32>
    %cst_79 = arith.constant 0.000000e+00 : f32
    %271 = vector.broadcast %cst_79 : f32 to vector<4x128xf32>
    %272 = arith.maximumf %270, %271 : vector<4x128xf32>
    %273 = vector.broadcast %263 : vector<1x128xf32> to vector<4x128xf32>
    %274 = vector.broadcast %247 : vector<4x1xf32> to vector<4x128xf32>
    %275 = arith.minimumf %273, %274 : vector<4x128xf32>
    %276 = vector.broadcast %257 : vector<1x128xf32> to vector<4x128xf32>
    %277 = vector.broadcast %245 : vector<4x1xf32> to vector<4x128xf32>
    %278 = arith.maximumf %276, %277 : vector<4x128xf32>
    %279 = arith.subf %275, %278 : vector<4x128xf32>
    %cst_80 = arith.constant 0.000000e+00 : f32
    %280 = vector.broadcast %cst_80 : f32 to vector<4x128xf32>
    %281 = arith.maximumf %279, %280 : vector<4x128xf32>
    %282 = arith.mulf %272, %281 : vector<4x128xf32>
    %283 = arith.subf %260, %254 : vector<1x128xf32>
    %284 = arith.subf %263, %257 : vector<1x128xf32>
    %285 = arith.mulf %283, %284 : vector<1x128xf32>
    %286 = arith.subf %246, %244 : vector<4x1xf32>
    %287 = arith.subf %247, %245 : vector<4x1xf32>
    %288 = arith.mulf %286, %287 : vector<4x1xf32>
    %289 = vector.broadcast %285 : vector<1x128xf32> to vector<4x128xf32>
    %290 = vector.broadcast %288 : vector<4x1xf32> to vector<4x128xf32>
    %291 = arith.addf %289, %290 : vector<4x128xf32>
    %292 = arith.subf %291, %282 : vector<4x128xf32>
    %293 = tpu.reciprocal %292 {approx = true} : vector<4x128xf32> -> vector<4x128xf32>
    %294 = arith.mulf %282, %293 : vector<4x128xf32>
    %295 = tpu.iota {dimensions = array<i32: 0>} : vector<4x128xi32>
    %296 = tpu.iota {dimensions = array<i32: 1>} : vector<4x128xi32>
    %cst_81 = arith.constant dense<0xFF800000> : vector<4xf32>
    %297 = vector.multi_reduction <maximumf>, %294, %cst_81 [1] : vector<4x128xf32> to vector<4xf32>
    %298 = vector.shape_cast %297 : vector<4xf32> to vector<4x1xf32>
    %299 = vector.broadcast %298 : vector<4x1xf32> to vector<4x128xf32>
    %300 = arith.cmpf oeq, %294, %299 : vector<4x128xf32>
    %c128_i32_82 = arith.constant 128 : i32
    %301 = vector.broadcast %c128_i32_82 : i32 to vector<4x128xi32>
    %302 = arith.select %300, %296, %301 : vector<4x128xi1>, vector<4x128xi32>
    %cst_83 = arith.constant dense<2147483647> : vector<4xi32>
    %303 = vector.multi_reduction <minsi>, %302, %cst_83 [1] : vector<4x128xi32> to vector<4xi32>
    %304 = vector.shape_cast %303 : vector<4xi32> to vector<4x1xi32>
    %cst_84 = arith.constant dense<0xFF800000> : vector<128xf32>
    %305 = vector.multi_reduction <maximumf>, %294, %cst_84 [0] : vector<4x128xf32> to vector<128xf32>
    %306 = vector.shape_cast %305 : vector<128xf32> to vector<1x128xf32>
    %307 = vector.broadcast %306 : vector<1x128xf32> to vector<4x128xf32>
    %308 = arith.cmpf oeq, %294, %307 : vector<4x128xf32>
    %c4_i32_85 = arith.constant 4 : i32
    %309 = vector.broadcast %c4_i32_85 : i32 to vector<4x128xi32>
    %310 = arith.select %308, %295, %309 : vector<4x128xi1>, vector<4x128xi32>
    %cst_86 = arith.constant dense<2147483647> : vector<128xi32>
    %311 = vector.multi_reduction <minsi>, %310, %cst_86 [0] : vector<4x128xi32> to vector<128xi32>
    %312 = vector.shape_cast %311 : vector<128xi32> to vector<1x128xi32>
    %313 = vector.broadcast %304 : vector<4x1xi32> to vector<4x128xi32>
    %314 = arith.cmpi eq, %296, %313 : vector<4x128xi32>
    %315 = arith.extui %314 : vector<4x128xi1> to vector<4x128xi32>
    %cst_87 = arith.constant dense<-2147483648> : vector<128xi32>
    %316 = vector.multi_reduction <maxsi>, %315, %cst_87 [0] : vector<4x128xi32> to vector<128xi32>
    %317 = vector.shape_cast %316 : vector<128xi32> to vector<1x128xi32>
    %c0_i32_88 = arith.constant 0 : i32
    %318 = vector.broadcast %c0_i32_88 : i32 to vector<1x128xi32>
    %319 = arith.cmpi sgt, %317, %318 : vector<1x128xi32>
    %c-1_i32_89 = arith.constant -1 : i32
    %320 = vector.broadcast %c-1_i32_89 : i32 to vector<4x128xi32>
    %321 = arith.select %314, %295, %320 : vector<4x128xi1>, vector<4x128xi32>
    %cst_90 = arith.constant dense<-2147483648> : vector<128xi32>
    %322 = vector.multi_reduction <maxsi>, %321, %cst_90 [0] : vector<4x128xi32> to vector<128xi32>
    %323 = vector.shape_cast %322 : vector<128xi32> to vector<1x128xi32>
    %cst_91 = arith.constant 2.000000e+00 : f32
    %324 = vector.broadcast %cst_91 : f32 to vector<1x128xf32>
    %325 = arith.select %319, %324, %306 : vector<1x128xi1>, vector<1x128xf32>
    %326 = arith.select %319, %323, %312 : vector<1x128xi1>, vector<1x128xi32>
    %327 = vector.broadcast %326 : vector<1x128xi32> to vector<4x128xi32>
    %328 = arith.cmpi eq, %295, %327 : vector<4x128xi32>
    %329 = arith.extui %328 : vector<4x128xi1> to vector<4x128xi32>
    %330 = arith.sitofp %329 : vector<4x128xi32> to vector<4x128xf32>
    %cst_92 = arith.constant dense<0.000000e+00> : vector<5x128xf32>
    %331 = tpu.matmul %239, %330, %cst_92 {dimension_numbers = #tpu.dot_dimension_numbers<[1], [0], [0], [1], [0, 0, 1, 1], [], []>} : vector<5x4xf32>, vector<4x128xf32>, vector<5x128xf32> -> vector<5x128xf32>
    %332 = vector.extract_strided_slice %331 {offsets = [0, 0], sizes = [1, 128], strides = [1, 1]} : vector<5x128xf32> to vector<1x128xf32>
    %333 = vector.extract_strided_slice %331 {offsets = [1, 0], sizes = [1, 128], strides = [1, 1]} : vector<5x128xf32> to vector<1x128xf32>
    %334 = vector.extract_strided_slice %331 {offsets = [2, 0], sizes = [1, 128], strides = [1, 1]} : vector<5x128xf32> to vector<1x128xf32>
    %335 = vector.extract_strided_slice %331 {offsets = [3, 0], sizes = [1, 128], strides = [1, 1]} : vector<5x128xf32> to vector<1x128xf32>
    %336 = vector.extract_strided_slice %331 {offsets = [4, 0], sizes = [1, 128], strides = [1, 1]} : vector<5x128xf32> to vector<1x128xf32>
    %cst_93 = arith.constant 5.000000e-01 : f32
    %337 = vector.broadcast %cst_93 : f32 to vector<1x128xf32>
    %338 = arith.cmpf olt, %325, %337 : vector<1x128xf32>
    %cst_94 = arith.constant 1.000000e+00 : f32
    %339 = vector.broadcast %cst_94 : f32 to vector<1x128xf32>
    %340 = arith.addf %336, %339 : vector<1x128xf32>
    %cst_95 = arith.constant 0.000000e+00 : f32
    %341 = vector.broadcast %cst_95 : f32 to vector<1x128xf32>
    %342 = arith.select %338, %341, %340 : vector<1x128xi1>, vector<1x128xf32>
    %cst_96 = arith.constant 0.000000e+00 : f32
    %343 = vector.broadcast %cst_96 : f32 to vector<1x128xf32>
    %344 = arith.cmpf ogt, %342, %343 : vector<1x128xf32>
    %345 = arith.extui %344 : vector<1x128xi1> to vector<1x128xi32>
    %346 = arith.sitofp %345 : vector<1x128xi32> to vector<1x128xf32>
    %cst_97 = arith.constant dense<0.000000e+00> : vector<1xf32>
    %347 = vector.multi_reduction <add>, %346, %cst_97 [1] : vector<1x128xf32> to vector<1xf32>
    %348 = vector.shape_cast %347 : vector<1xf32> to vector<1x1xf32>
    %349 = arith.addf %332, %334 : vector<1x128xf32>
    %cst_98 = arith.constant 5.000000e-01 : f32
    %350 = vector.broadcast %cst_98 : f32 to vector<1x128xf32>
    %351 = arith.mulf %349, %350 : vector<1x128xf32>
    %352 = arith.subf %351, %248 : vector<1x128xf32>
    %cst_99 = arith.constant 1.000000e-01 : f32
    %353 = vector.broadcast %cst_99 : f32 to vector<1x128xf32>
    %354 = arith.mulf %353, %250 : vector<1x128xf32>
    %355 = arith.divf %352, %354 : vector<1x128xf32>
    %356 = arith.addf %333, %335 : vector<1x128xf32>
    %cst_100 = arith.constant 5.000000e-01 : f32
    %357 = vector.broadcast %cst_100 : f32 to vector<1x128xf32>
    %358 = arith.mulf %356, %357 : vector<1x128xf32>
    %359 = arith.subf %358, %249 : vector<1x128xf32>
    %cst_101 = arith.constant 1.000000e-01 : f32
    %360 = vector.broadcast %cst_101 : f32 to vector<1x128xf32>
    %361 = arith.mulf %360, %251 : vector<1x128xf32>
    %362 = arith.divf %359, %361 : vector<1x128xf32>
    %363 = arith.subf %334, %332 : vector<1x128xf32>
    %364 = arith.select %344, %363, %250 : vector<1x128xi1>, vector<1x128xf32>
    %365 = arith.subf %335, %333 : vector<1x128xf32>
    %366 = arith.select %344, %365, %251 : vector<1x128xi1>, vector<1x128xf32>
    %367 = arith.divf %364, %250 : vector<1x128xf32>
    %368 = math.log %367 : vector<1x128xf32>
    %cst_102 = arith.constant 2.000000e-01 : f32
    %369 = vector.broadcast %cst_102 : f32 to vector<1x128xf32>
    %370 = arith.divf %368, %369 : vector<1x128xf32>
    %371 = arith.divf %366, %251 : vector<1x128xf32>
    %372 = math.log %371 : vector<1x128xf32>
    %cst_103 = arith.constant 2.000000e-01 : f32
    %373 = vector.broadcast %cst_103 : f32 to vector<1x128xf32>
    %374 = arith.divf %372, %373 : vector<1x128xf32>
    %375 = vector.extract_strided_slice %241 {offsets = [0, 0], sizes = [1, 128], strides = [1, 1]} : vector<4x128xf32> to vector<1x128xf32>
    %376 = arith.subf %375, %355 : vector<1x128xf32>
    %377 = math.absf %376 : vector<1x128xf32>
    %cst_104 = arith.constant 1.000000e+00 : f32
    %378 = vector.broadcast %cst_104 : f32 to vector<1x128xf32>
    %379 = arith.cmpf olt, %377, %378 : vector<1x128xf32>
    %cst_105 = arith.constant 5.000000e-01 : f32
    %380 = vector.broadcast %cst_105 : f32 to vector<1x128xf32>
    %381 = arith.mulf %380, %376 : vector<1x128xf32>
    %382 = arith.mulf %381, %376 : vector<1x128xf32>
    %cst_106 = arith.constant 5.000000e-01 : f32
    %383 = vector.broadcast %cst_106 : f32 to vector<1x128xf32>
    %384 = arith.subf %377, %383 : vector<1x128xf32>
    %385 = arith.select %379, %382, %384 : vector<1x128xi1>, vector<1x128xf32>
    %386 = vector.extract_strided_slice %241 {offsets = [1, 0], sizes = [1, 128], strides = [1, 1]} : vector<4x128xf32> to vector<1x128xf32>
    %387 = arith.subf %386, %362 : vector<1x128xf32>
    %388 = math.absf %387 : vector<1x128xf32>
    %cst_107 = arith.constant 1.000000e+00 : f32
    %389 = vector.broadcast %cst_107 : f32 to vector<1x128xf32>
    %390 = arith.cmpf olt, %388, %389 : vector<1x128xf32>
    %cst_108 = arith.constant 5.000000e-01 : f32
    %391 = vector.broadcast %cst_108 : f32 to vector<1x128xf32>
    %392 = arith.mulf %391, %387 : vector<1x128xf32>
    %393 = arith.mulf %392, %387 : vector<1x128xf32>
    %cst_109 = arith.constant 5.000000e-01 : f32
    %394 = vector.broadcast %cst_109 : f32 to vector<1x128xf32>
    %395 = arith.subf %388, %394 : vector<1x128xf32>
    %396 = arith.select %390, %393, %395 : vector<1x128xi1>, vector<1x128xf32>
    %397 = arith.addf %385, %396 : vector<1x128xf32>
    %398 = vector.extract_strided_slice %241 {offsets = [2, 0], sizes = [1, 128], strides = [1, 1]} : vector<4x128xf32> to vector<1x128xf32>
    %399 = arith.subf %398, %370 : vector<1x128xf32>
    %400 = math.absf %399 : vector<1x128xf32>
    %cst_110 = arith.constant 1.000000e+00 : f32
    %401 = vector.broadcast %cst_110 : f32 to vector<1x128xf32>
    %402 = arith.cmpf olt, %400, %401 : vector<1x128xf32>
    %cst_111 = arith.constant 5.000000e-01 : f32
    %403 = vector.broadcast %cst_111 : f32 to vector<1x128xf32>
    %404 = arith.mulf %403, %399 : vector<1x128xf32>
    %405 = arith.mulf %404, %399 : vector<1x128xf32>
    %cst_112 = arith.constant 5.000000e-01 : f32
    %406 = vector.broadcast %cst_112 : f32 to vector<1x128xf32>
    %407 = arith.subf %400, %406 : vector<1x128xf32>
    %408 = arith.select %402, %405, %407 : vector<1x128xi1>, vector<1x128xf32>
    %409 = arith.addf %397, %408 : vector<1x128xf32>
    %410 = vector.extract_strided_slice %241 {offsets = [3, 0], sizes = [1, 128], strides = [1, 1]} : vector<4x128xf32> to vector<1x128xf32>
    %411 = arith.subf %410, %374 : vector<1x128xf32>
    %412 = math.absf %411 : vector<1x128xf32>
    %cst_113 = arith.constant 1.000000e+00 : f32
    %413 = vector.broadcast %cst_113 : f32 to vector<1x128xf32>
    %414 = arith.cmpf olt, %412, %413 : vector<1x128xf32>
    %cst_114 = arith.constant 5.000000e-01 : f32
    %415 = vector.broadcast %cst_114 : f32 to vector<1x128xf32>
    %416 = arith.mulf %415, %411 : vector<1x128xf32>
    %417 = arith.mulf %416, %411 : vector<1x128xf32>
    %cst_115 = arith.constant 5.000000e-01 : f32
    %418 = vector.broadcast %cst_115 : f32 to vector<1x128xf32>
    %419 = arith.subf %412, %418 : vector<1x128xf32>
    %420 = arith.select %414, %417, %419 : vector<1x128xi1>, vector<1x128xf32>
    %421 = arith.addf %409, %420 : vector<1x128xf32>
    %422 = arith.mulf %421, %346 : vector<1x128xf32>
    %cst_116 = arith.constant dense<0.000000e+00> : vector<1xf32>
    %423 = vector.multi_reduction <add>, %422, %cst_116 [1] : vector<1x128xf32> to vector<1xf32>
    %424 = vector.shape_cast %423 : vector<1xf32> to vector<1x1xf32>
    %cst_117 = arith.constant dense<0xFF800000> : vector<128xf32>
    %425 = vector.multi_reduction <maximumf>, %243, %cst_117 [0] : vector<21x128xf32> to vector<128xf32>
    %426 = vector.shape_cast %425 : vector<128xf32> to vector<1x128xf32>
    %427 = vector.broadcast %426 : vector<1x128xf32> to vector<21x128xf32>
    %428 = arith.subf %243, %427 : vector<21x128xf32>
    %429 = math.exp %428 : vector<21x128xf32>
    %cst_118 = arith.constant dense<0.000000e+00> : vector<128xf32>
    %430 = vector.multi_reduction <add>, %429, %cst_118 [0] : vector<21x128xf32> to vector<128xf32>
    %431 = vector.shape_cast %430 : vector<128xf32> to vector<1x128xf32>
    %432 = math.log %431 : vector<1x128xf32>
    %433 = arith.addf %432, %426 : vector<1x128xf32>
    %434 = tpu.iota {dimensions = array<i32: 0>} : vector<21x128xi32>
    %435 = arith.fptosi %342 : vector<1x128xf32> to vector<1x128xi32>
    %436 = vector.broadcast %435 : vector<1x128xi32> to vector<21x128xi32>
    %437 = arith.cmpi eq, %434, %436 : vector<21x128xi32>
    %438 = arith.extui %437 : vector<21x128xi1> to vector<21x128xi32>
    %439 = arith.sitofp %438 : vector<21x128xi32> to vector<21x128xf32>
    %440 = arith.mulf %243, %439 : vector<21x128xf32>
    %cst_119 = arith.constant dense<0.000000e+00> : vector<128xf32>
    %441 = vector.multi_reduction <add>, %440, %cst_119 [0] : vector<21x128xf32> to vector<128xf32>
    %442 = vector.shape_cast %441 : vector<128xf32> to vector<1x128xf32>
    %443 = arith.subf %433, %442 : vector<1x128xf32>
    %cst_120 = arith.constant -1.000000e+00 : f32
    %444 = vector.broadcast %cst_120 : f32 to vector<1x128xf32>
    %445 = arith.select %344, %444, %443 : vector<1x128xi1>, vector<1x128xf32>
    %cst_121 = arith.constant 3.000000e+00 : f32
    %446 = vector.broadcast %cst_121 : f32 to vector<1x1xf32>
    %447 = arith.mulf %446, %348 : vector<1x1xf32>
    %cst_122 = arith.constant 1.270000e+02 : f32
    %448 = vector.broadcast %cst_122 : f32 to vector<1x1xf32>
    %449 = arith.minimumf %447, %448 : vector<1x1xf32>
    %cst_123 = arith.constant 0.000000e+00 : f32
    %450 = vector.broadcast %cst_123 : f32 to vector<1x1xf32>
    %cst_124 = arith.constant dense<0xFF800000> : vector<1xf32>
    %451 = vector.multi_reduction <maximumf>, %443, %cst_124 [1] : vector<1x128xf32> to vector<1xf32>
    %452 = vector.shape_cast %451 : vector<1xf32> to vector<1x1xf32>
    %cst_125 = arith.constant 1.000000e+00 : f32
    %453 = vector.broadcast %cst_125 : f32 to vector<1x1xf32>
    %454 = arith.addf %452, %453 : vector<1x1xf32>
    %c0_i32_126 = arith.constant 0 : i32
    %c32_i32_127 = arith.constant 32 : i32
    %455 = arith.addi %c0_i32_126, %c32_i32_127 : i32
    %c1_i32_128 = arith.constant 1 : i32
    %456:2 = scf.for %arg7 = %c0_i32_126 to %455 step %c1_i32_128 iter_args(%arg8 = %450, %arg9 = %454) -> (vector<1x1xf32>, vector<1x1xf32>)  : i32 {
      %492 = arith.addf %arg8, %arg9 : vector<1x1xf32>
      %cst_138 = arith.constant 5.000000e-01 : f32
      %493 = vector.broadcast %cst_138 : f32 to vector<1x1xf32>
      %494 = arith.mulf %493, %492 : vector<1x1xf32>
      %495 = vector.broadcast %494 : vector<1x1xf32> to vector<1x128xf32>
      %496 = arith.cmpf oge, %445, %495 : vector<1x128xf32>
      %497 = arith.extui %496 : vector<1x128xi1> to vector<1x128xi32>
      %498 = arith.sitofp %497 : vector<1x128xi32> to vector<1x128xf32>
      %cst_139 = arith.constant dense<0.000000e+00> : vector<1xf32>
      %499 = vector.multi_reduction <add>, %498, %cst_139 [1] : vector<1x128xf32> to vector<1xf32>
      %500 = vector.shape_cast %499 : vector<1xf32> to vector<1x1xf32>
      %501 = arith.cmpf oge, %500, %449 : vector<1x1xf32>
      %502 = arith.select %501, %494, %arg8 : vector<1x1xi1>, vector<1x1xf32>
      %503 = arith.select %501, %arg9, %494 : vector<1x1xi1>, vector<1x1xf32>
      scf.yield %502, %503 : vector<1x1xf32>, vector<1x1xf32>
    }
    %457 = vector.broadcast %456#0 : vector<1x1xf32> to vector<1x128xf32>
    %458 = arith.cmpf oge, %445, %457 : vector<1x128xf32>
    %459 = arith.ori %344, %458 : vector<1x128xi1>
    %460 = arith.extui %459 : vector<1x128xi1> to vector<1x128xi32>
    %461 = arith.sitofp %460 : vector<1x128xi32> to vector<1x128xf32>
    %462 = arith.mulf %443, %461 : vector<1x128xf32>
    %cst_129 = arith.constant dense<0.000000e+00> : vector<1xf32>
    %463 = vector.multi_reduction <add>, %462, %cst_129 [1] : vector<1x128xf32> to vector<1xf32>
    %464 = vector.shape_cast %463 : vector<1xf32> to vector<1x1xf32>
    %465 = arith.addf %233, %424 : vector<1x1xf32>
    %466 = arith.addf %234, %464 : vector<1x1xf32>
    %467 = arith.addf %235, %348 : vector<1x1xf32>
    %468 = tpu.iota {dimensions = array<i32: 1>} : vector<8x128xi32>
    %c0_i32_130 = arith.constant 0 : i32
    %469 = vector.broadcast %c0_i32_130 : i32 to vector<8x128xi32>
    %470 = arith.cmpi eq, %468, %469 : vector<8x128xi32>
    %cst_131 = arith.constant 0.000000e+00 : f32
    %471 = vector.shape_cast %465 : vector<1x1xf32> to vector<1x1xf32>
    %472 = vector.broadcast %471 : vector<1x1xf32> to vector<8x128xf32>
    %473 = vector.broadcast %cst_131 : f32 to vector<8x128xf32>
    %474 = arith.select %470, %472, %473 : vector<8x128xi1>, vector<8x128xf32>
    %c1_i32_132 = arith.constant 1 : i32
    %475 = vector.broadcast %c1_i32_132 : i32 to vector<8x128xi32>
    %476 = arith.cmpi eq, %468, %475 : vector<8x128xi32>
    %cst_133 = arith.constant 0.000000e+00 : f32
    %477 = vector.shape_cast %466 : vector<1x1xf32> to vector<1x1xf32>
    %478 = vector.broadcast %477 : vector<1x1xf32> to vector<8x128xf32>
    %479 = vector.broadcast %cst_133 : f32 to vector<8x128xf32>
    %480 = arith.select %476, %478, %479 : vector<8x128xi1>, vector<8x128xf32>
    %481 = arith.addf %474, %480 : vector<8x128xf32>
    %c2_i32 = arith.constant 2 : i32
    %482 = vector.broadcast %c2_i32 : i32 to vector<8x128xi32>
    %483 = arith.cmpi eq, %468, %482 : vector<8x128xi32>
    %cst_134 = arith.constant 0.000000e+00 : f32
    %484 = vector.shape_cast %467 : vector<1x1xf32> to vector<1x1xf32>
    %485 = vector.broadcast %484 : vector<1x1xf32> to vector<8x128xf32>
    %486 = vector.broadcast %cst_134 : f32 to vector<8x128xf32>
    %487 = arith.select %483, %485, %486 : vector<8x128xi1>, vector<8x128xf32>
    %488 = arith.addf %481, %487 : vector<8x128xf32>
    %c0_135 = arith.constant 0 : index
    %c0_136 = arith.constant 0 : index
    %c0_137 = arith.constant 0 : index
    %489 = vector.load %arg6[%c0_135, %c0_136, %c0_137] : memref<1x8x128xf32, #tpu.memory_space<vmem>>, vector<1x8x128xf32>
    %490 = vector.shape_cast %489 : vector<1x8x128xf32> to vector<8x128xf32>
    %491 = vector.shape_cast %488 : vector<8x128xf32> to vector<1x8x128xf32>
    tpu.vector_store %arg6[%c0_135, %c0_136, %c0_137], %491 {strides = array<i32>} : memref<1x8x128xf32, #tpu.memory_space<vmem>>, vector<1x8x128xf32>,
    return
  }
  func.func @transform_0(%arg0: i32) -> (i32, i32, i32) {
    %c0_i32 = arith.constant 0 : i32
    %c0_i32_0 = arith.constant 0 : i32
    %c0_i32_1 = arith.constant 0 : i32
    return %arg0, %c0_i32, %c0_i32_0 : i32, i32, i32
  }
  func.func @transform_1(%arg0: i32) -> (i32, i32, i32) {
    %c0_i32 = arith.constant 0 : i32
    %c0_i32_0 = arith.constant 0 : i32
    %c0_i32_1 = arith.constant 0 : i32
    return %arg0, %c0_i32, %c0_i32_0 : i32, i32, i32
  }
  func.func @transform_2(%arg0: i32) -> (i32, i32) {
    %c0_i32 = arith.constant 0 : i32
    %c0_i32_0 = arith.constant 0 : i32
    %c0_i32_1 = arith.constant 0 : i32
    return %c0_i32, %c0_i32_0 : i32, i32
  }
  func.func @transform_3(%arg0: i32) -> (i32, i32, i32) {
    %c0_i32 = arith.constant 0 : i32
    %c0_i32_0 = arith.constant 0 : i32
    %c0_i32_1 = arith.constant 0 : i32
    return %arg0, %c0_i32, %c0_i32_0 : i32, i32, i32
  }
  func.func @transform_4(%arg0: i32) -> (i32, i32, i32) {
    %c0_i32 = arith.constant 0 : i32
    %c0_i32_0 = arith.constant 0 : i32
    %c0_i32_1 = arith.constant 0 : i32
    return %arg0, %c0_i32, %c0_i32_0 : i32, i32, i32
  }
  func.func @transform_5(%arg0: i32) -> (i32, i32, i32) {
    %c0_i32 = arith.constant 0 : i32
    %c0_i32_0 = arith.constant 0 : i32
    %c0_i32_1 = arith.constant 0 : i32
    return %arg0, %c0_i32, %c0_i32_0 : i32, i32, i32
  }
}

</mosaic_0001>

<llo_original>
// kernel: tpu_custom_call.1
$region0: #{tpu_custom_call.1}
  #allocation0 [shape = 'u32[]', space=smem, size = 0x4, offset = 0x4, fixed_abs, tag = 'smem constant byte address 0x4 - core index']
  #allocation1 [shape = 'u32[144,128]{1,0:T(1,128)}', space=vmem, size = 0x12000, scoped, tag = 'internal scratch']
  %s0 = inlined_call_operand.vmem [shape: f32[4,4,5], index: 0, kind: input, shape index: {}]
  %s1 = inlined_call_operand.vmem [shape: f32[4,5,4], index: 1, kind: input, shape index: {}]
  %s2 = inlined_call_operand.vmem [shape: f32[4,128], index: 2, kind: input, shape index: {}]
  %s3 = inlined_call_operand.vmem [shape: f32[4,4,128], index: 3, kind: input, shape index: {}]
  %s4 = inlined_call_operand.vmem [shape: f32[4,21,128], index: 4, kind: input, shape index: {}]
  %s5 = inlined_call_operand.hbm [shape: f32[2,8,128], index: 5, kind: output, shape index: {}]
  %s6 = sld [smem:[#allocation0]]
  $region67: #{tpu_custom_call.1} parent=0
    _
  %s8 = ssub.s32 1, %s6
  %s9 = scalar_select 0, %s8, %s6
  $region1: #{tpu_custom_call.1} parent=0
    #allocation2 [shape = 'u8[8192]{0}', space=vmem, size = 0x2000, scoped, tag = 'output window, operand 0']
    #allocation3 [shape = 's32[2]{0}', space=sflag, size = 0x8, scoped, tag = 'scoped memory for tpu_custom_call.1']
    %10 = vsyncpa [#allocation3], 0
    %s11 = scalar_lea.sflag [#allocation3], 1
    %12 = vsyncpa %s11, 0
    loop: start=0, step=1, limit=4
    $region2: #{tpu_custom_call.1} parent=1 // loop_pre_header
      _
    $region3: #{tpu_custom_call.1} parent=1 // loop_header
      %s14 = sphi 0, %s18
      %p15 = scmp.ge.s32.totalorder %s14, 4
      %s24 = sphi 0, %s26
      %s27 = sphi 0, %s24
      %s28 = sphi 0, %s27
      %s44 = sphi 0, %s28
      %s50 = sphi 0, %s52
      %s53 = sphi 0, %s50
      %s54 = sphi 0, %s53
      %s70 = sphi 0, %s54
      %s74 = sphi 0, %s74
      %s76 = sphi 0, %s74
      %s77 = sphi 0, %s76
      %s91 = sphi 0, %s77
      %s97 = sphi 0, %s99
      %s100 = sphi 0, %s97
      %s101 = sphi 0, %s100
      %s117 = sphi 0, %s101
      %s123 = sphi 0, %s125
      %s126 = sphi 0, %s123
      %s127 = sphi 0, %s126
      %s143 = sphi 0, %s127
      %s149 = sphi 0, %s151
      %s152 = sphi 0, %s149
      %s153 = sphi 0, %s152
      %s169 = sphi 0, %s153
    $region4: #{tpu_custom_call.1} parent=1 // loop_header_branch
      %17 = sbr.rel (%p15) target = $region8
    $region5: #{tpu_custom_call.1} parent=1 // loop_body
      %s19 = ssub.s32 %s14, 1
      %s20 = ssub.s32 %s14, 2
      %s21 = sadd.s32 %s14, 1
      %s22 = ssub.s32 %s14, %s21
      %p23 = scmp.eq.s32.totalorder %s22, 0
      %s25 = sadd.s32 %s24, 1
      %s26 = scalar_select %p23, %s24, %s25
      %p29 = pneg %p23
      %p30 = scmp.eq.s32.totalorder %s14, 1
      %p31 = por %p29, %p30
      %p32 = scmp.ne.s32.totalorder %s24, %s27
      %p33 = scmp.eq.s32.totalorder %s14, 0
      %p34 = por %p32, %p33
      %p35 = scmp.ne.s32.totalorder %s24, %s27
      %p36 = scmp.eq.s32.totalorder %s19, 1
      %p37 = por %p35, %p36
      %p38 = scmp.ne.s32.totalorder %s27, %s28
      %p39 = scmp.eq.s32.totalorder %s19, 0
      %p40 = por %p38, %p39
      %p41 = scmp.ne.s32.totalorder %s27, %s28
      %p42 = scmp.eq.s32.totalorder %s20, 1
      %p43 = por %p41, %p42
      %p45 = scmp.ne.s32.totalorder %s28, %s44
      %p46 = scmp.eq.s32.totalorder %s20, 0
      %p47 = por %p45, %p46
      %s48 = ssub.s32 %s14, %s21
      %p49 = scmp.eq.s32.totalorder %s48, 0
      %s51 = sadd.s32 %s50, 1
      %s52 = scalar_select %p49, %s50, %s51
      %p55 = pneg %p49
      %p56 = scmp.eq.s32.totalorder %s14, 1
      %p57 = por %p55, %p56
      %p58 = scmp.ne.s32.totalorder %s50, %s53
      %p59 = scmp.eq.s32.totalorder %s14, 0
      %p60 = por %p58, %p59
      %p61 = scmp.ne.s32.totalorder %s50, %s53
      %p62 = scmp.eq.s32.totalorder %s19, 1
      %p63 = por %p61, %p62
      %p64 = scmp.ne.s32.totalorder %s53, %s54
      %p65 = scmp.eq.s32.totalorder %s19, 0
      %p66 = por %p64, %p65
      %p67 = scmp.ne.s32.totalorder %s53, %s54
      %p68 = scmp.eq.s32.totalorder %s20, 1
      %p69 = por %p67, %p68
      %p71 = scmp.ne.s32.totalorder %s54, %s70
      %p72 = scmp.eq.s32.totalorder %s20, 0
      %p73 = por %p71, %p72
      %s75 = sadd.s32 %s74, 1
      %p78 = scmp.eq.s32.totalorder %s14, 1
      %p79 = scmp.ne.s32.totalorder %s74, %s76
      %p80 = scmp.eq.s32.totalorder %s14, 0
      %p81 = por %p79, %p80
      %p82 = scmp.ne.s32.totalorder %s74, %s76
      %p83 = scmp.eq.s32.totalorder %s19, 1
      %p84 = por %p82, %p83
      %p85 = scmp.ne.s32.totalorder %s76, %s77
      %p86 = scmp.eq.s32.totalorder %s19, 0
      %p87 = por %p85, %p86
      %p88 = scmp.ne.s32.totalorder %s76, %s77
      %p89 = scmp.eq.s32.totalorder %s20, 1
      %p90 = por %p88, %p89
      %p92 = scmp.ne.s32.totalorder %s77, %s91
      %p93 = scmp.eq.s32.totalorder %s20, 0
      %p94 = por %p92, %p93
      %s95 = ssub.s32 %s14, %s21
      %p96 = scmp.eq.s32.totalorder %s95, 0
      %s98 = sadd.s32 %s97, 1
      %s99 = scalar_select %p96, %s97, %s98
      %p102 = pneg %p96
      %p103 = scmp.eq.s32.totalorder %s14, 1
      %p104 = por %p102, %p103
      %p105 = scmp.ne.s32.totalorder %s97, %s100
      %p106 = scmp.eq.s32.totalorder %s14, 0
      %p107 = por %p105, %p106
      %p108 = scmp.ne.s32.totalorder %s97, %s100
      %p109 = scmp.eq.s32.totalorder %s19, 1
      %p110 = por %p108, %p109
      %p111 = scmp.ne.s32.totalorder %s100, %s101
      %p112 = scmp.eq.s32.totalorder %s19, 0
      %p113 = por %p111, %p112
      %p114 = scmp.ne.s32.totalorder %s100, %s101
      %p115 = scmp.eq.s32.totalorder %s20, 1
      %p116 = por %p114, %p115
      %p118 = scmp.ne.s32.totalorder %s101, %s117
      %p119 = scmp.eq.s32.totalorder %s20, 0
      %p120 = por %p118, %p119
      %s121 = ssub.s32 %s14, %s21
      %p122 = scmp.eq.s32.totalorder %s121, 0
      %s124 = sadd.s32 %s123, 1
      %s125 = scalar_select %p122, %s123, %s124
      %p128 = pneg %p122
      %p129 = scmp.eq.s32.totalorder %s14, 1
      %p130 = por %p128, %p129
      %p131 = scmp.ne.s32.totalorder %s123, %s126
      %p132 = scmp.eq.s32.totalorder %s14, 0
      %p133 = por %p131, %p132
      %p134 = scmp.ne.s32.totalorder %s123, %s126
      %p135 = scmp.eq.s32.totalorder %s19, 1
      %p136 = por %p134, %p135
      %p137 = scmp.ne.s32.totalorder %s126, %s127
      %p138 = scmp.eq.s32.totalorder %s19, 0
      %p139 = por %p137, %p138
      %p140 = scmp.ne.s32.totalorder %s126, %s127
      %p141 = scmp.eq.s32.totalorder %s20, 1
      %p142 = por %p140, %p141
      %p144 = scmp.ne.s32.totalorder %s127, %s143
      %p145 = scmp.eq.s32.totalorder %s20, 0
      %p146 = por %p144, %p145
      %s147 = ssub.s32 %s14, %s21
      %p148 = scmp.eq.s32.totalorder %s147, 0
      %s150 = sadd.s32 %s149, 1
      %s151 = scalar_select %p148, %s149, %s150
      %p154 = pneg %p148
      %p155 = scmp.eq.s32.totalorder %s14, 1
      %p156 = por %p154, %p155
      %p157 = scmp.ne.s32.totalorder %s149, %s152
      %p158 = scmp.eq.s32.totalorder %s14, 0
      %p159 = por %p157, %p158
      %p160 = scmp.ne.s32.totalorder %s149, %s152
      %p161 = scmp.eq.s32.totalorder %s19, 1
      %p162 = por %p160, %p161
      %p163 = scmp.ne.s32.totalorder %s152, %s153
      %p164 = scmp.eq.s32.totalorder %s19, 0
      %p165 = por %p163, %p164
      %p166 = scmp.ne.s32.totalorder %s152, %s153
      %p167 = scmp.eq.s32.totalorder %s20, 1
      %p168 = por %p166, %p167
      %p170 = scmp.ne.s32.totalorder %s153, %s169
      %p171 = scmp.eq.s32.totalorder %s20, 0
      %p172 = por %p170, %p171
      %p173 = scmp.le.s32.totalorder 1, %s14
      %p174 = scmp.lt.s32.totalorder %s14, 3
      %p175 = pnand %p173, %p174
      %p176 = pneg %p175
      // Predicated region
      $region9: #{tpu_custom_call.1} parent=5 // pred_check
        _
      $region10: #{tpu_custom_call.1} parent=5 // pred_check_branch
        %178 = sbr.rel (%p175) target = $region12
      $region11: #{tpu_custom_call.1} parent=5 // pred_region
        %s179 = ssub.s32 %s14, 1
        // Predicated region
        $region13: #{tpu_custom_call.1} parent=11 // pred_check
          %p180 = pneg %p87
        $region14: #{tpu_custom_call.1} parent=11 // pred_check_branch
          %182 = sbr.rel (%p180) target = $region16
        $region15: #{tpu_custom_call.1} parent=11 // pred_region
          _
        $region16: #{tpu_custom_call.1} parent=11 // pred_fallthru
          _
      $region12: #{tpu_custom_call.1} parent=5 // pred_fallthru
        _
      %p183 = scmp.lt.s32.totalorder %s14, 2
      // Predicated region
      $region17: #{tpu_custom_call.1} parent=5 // pred_check
        %p184 = pneg %p183
      $region18: #{tpu_custom_call.1} parent=5 // pred_check_branch
        %186 = sbr.rel (%p184) target = $region20
      $region19: #{tpu_custom_call.1} parent=5 // pred_region
        // Predicated region
        $region21: #{tpu_custom_call.1} parent=19 // pred_check
          %p187 = pneg %p34
        $region22: #{tpu_custom_call.1} parent=19 // pred_check_branch
          %189 = sbr.rel (%p187) target = $region24
        $region23: #{tpu_custom_call.1} parent=19 // pred_region
          %s190 = smul.u32 2, %s14
          %p191 = scmp.lt.s32.totalorder %s190, 3
          %s192 = scalar_select %p191, %s190, 3
          %s193 = smul.addr %s192, 4
          %s194 = scalar_lea.vmem %s0, %s193
          %s195 = smul.u32 2, %s14
        $region24: #{tpu_custom_call.1} parent=19 // pred_fallthru
          _
        // Predicated region
        $region25: #{tpu_custom_call.1} parent=19 // pred_check
          %p196 = pneg %p60
        $region26: #{tpu_custom_call.1} parent=19 // pred_check_branch
          %198 = sbr.rel (%p196) target = $region28
        $region27: #{tpu_custom_call.1} parent=19 // pred_region
          %s199 = smul.u32 2, %s14
          %p200 = scmp.lt.s32.totalorder %s199, 3
          %s201 = scalar_select %p200, %s199, 3
          %s202 = smul.addr %s201, 8
          %s203 = scalar_lea.vmem %s1, %s202
          %s204 = smul.u32 2, %s14
        $region28: #{tpu_custom_call.1} parent=19 // pred_fallthru
          _
        // Predicated region
        $region29: #{tpu_custom_call.1} parent=19 // pred_check
          %p205 = pneg %p107
        $region30: #{tpu_custom_call.1} parent=19 // pred_check_branch
          %207 = sbr.rel (%p205) target = $region32
        $region31: #{tpu_custom_call.1} parent=19 // pred_region
          %s208 = smul.u32 2, %s14
          %p209 = scmp.lt.s32.totalorder %s208, 3
          %s210 = scalar_select %p209, %s208, 3
          %s211 = smul.addr %s210, 4
          %s212 = scalar_lea.vmem %s3, %s211
          %s213 = smul.u32 2, %s14
        $region32: #{tpu_custom_call.1} parent=19 // pred_fallthru
          _
        // Predicated region
        $region33: #{tpu_custom_call.1} parent=19 // pred_check
          %p214 = pneg %p133
        $region34: #{tpu_custom_call.1} parent=19 // pred_check_branch
          %216 = sbr.rel (%p214) target = $region36
        $region35: #{tpu_custom_call.1} parent=19 // pred_region
          %s217 = smul.u32 2, %s14
          %p218 = scmp.lt.s32.totalorder %s217, 3
          %s219 = scalar_select %p218, %s217, 3
          %s220 = smul.addr %s219, 3
          %s221 = smul.addr %s220, 8
          %s222 = scalar_lea.vmem %s4, %s221
          %s223 = smul.u32 2, %s14
        $region36: #{tpu_custom_call.1} parent=19 // pred_fallthru
          _
      $region20: #{tpu_custom_call.1} parent=5 // pred_fallthru
        _
      %p224 = scmp.le.s32.totalorder 1, %s14
      %p225 = scmp.lt.s32.totalorder %s14, 3
      %p226 = pnand %p224, %p225
      %p227 = pneg %p226
      // Predicated region
      $region37: #{tpu_custom_call.1} parent=5 // pred_check
        _
      $region38: #{tpu_custom_call.1} parent=5 // pred_check_branch
        %229 = sbr.rel (%p226) target = $region40
      $region39: #{tpu_custom_call.1} parent=5 // pred_region
        %s230 = ssub.s32 %s14, 1
        %s231 = smul.u32 2, %s19
        %p232 = scmp.lt.s32.totalorder %s231, 3
        %s233 = scalar_select %p232, %s231, 3
        %s234 = smul.addr %s233, 4
        %s235 = scalar_lea.vmem %s0, %s234
        %p236 = pneg %p40
        %p237 = pneg %p37
        %s238 = smul.u32 2, %s19
        %p239 = scmp.lt.s32.totalorder %s238, 3
        %s240 = scalar_select %p239, %s238, 3
        %s241 = smul.addr %s240, 8
        %s242 = scalar_lea.vmem %s1, %s241
        %p243 = pneg %p66
        %p244 = pneg %p63
        %p245 = pneg %p87
        %p246 = pneg %p84
        %s247 = smul.u32 2, %s19
        %p248 = scmp.lt.s32.totalorder %s247, 3
        %s249 = scalar_select %p248, %s247, 3
        %s250 = smul.addr %s249, 4
        %s251 = scalar_lea.vmem %s3, %s250
        %p252 = pneg %p113
        %p253 = pneg %p110
        %s254 = smul.u32 2, %s19
        %p255 = scmp.lt.s32.totalorder %s254, 3
        %s256 = scalar_select %p255, %s254, 3
        %s257 = smul.addr %s256, 3
        %s258 = smul.addr %s257, 8
        %s259 = scalar_lea.vmem %s4, %s258
        %p260 = pneg %p139
        %p261 = pneg %p136
        %p262 = pneg %p165
        %p263 = pneg %p162
        %s264 = sand.u32 %s152, 1
        %s265 = scalar_lea.sflag [#allocation3], %s264
        %s266 = sand.u32 %s152, 1
        %s267 = smul.addr %s266, 8
        %s268 = scalar_lea.vmem [#allocation2], %s267
        %s269 = smul.u32 2, %s19
        %p270 = scmp.lt.s32.totalorder %s269, 3
        %s271 = scalar_select %p270, %s269, 3
        %s272 = smul.addr %s271, 4
        %s273 = scalar_lea.vmem %s0, %s272
        %s274 = smul.u32 2, %s19
        %s275 = smul.u32 2, %s19
        %p276 = scmp.lt.s32.totalorder %s275, 3
        %s277 = scalar_select %p276, %s275, 3
        %s278 = smul.addr %s277, 8
        %s279 = scalar_lea.vmem %s1, %s278
        %s280 = smul.u32 2, %s19
        %s281 = smul.u32 2, %s19
        %p282 = scmp.lt.s32.totalorder %s281, 3
        %s283 = scalar_select %p282, %s281, 3
        %s284 = smul.addr %s283, 4
        %s285 = scalar_lea.vmem %s3, %s284
        %s286 = smul.u32 2, %s19
        %s287 = smul.u32 2, %s19
        %p288 = scmp.lt.s32.totalorder %s287, 3
        %s289 = scalar_select %p288, %s287, 3
        %s290 = smul.addr %s289, 3
        %s291 = smul.addr %s290, 8
        %s292 = scalar_lea.vmem %s4, %s291
        %s293 = smul.u32 2, %s19
        %v294 = vld [vmem:[%s2] sm:$0xf]
        %v295 = vld [vmem:[%s273] sm:$0xf]
        %v296 = vld [vmem:[%s279] sm:$0x1f]
        %v297 = vld [vmem:[%s285] sm:$0xf]
        %v298 = vld [vmem:[%s292] sm:$0xff]
        %v299 = vld [vmem:[%s292 + $0x8] sm:$0xff]
        %v300 = vld [vmem:[%s292 + $0x10] sm:$0x1f]
        %v301 = vmul.f32 %v294, 0.5
        %v303 = vrot.slane %v301, 2
        %v305 = vsub.f32 %v294, %v303
        %v306 = vadd.f32 %v294, %v303
        %v307 = vlaneseq
        %v308 = vshrl.u32 %v307, 7
        %v309 = vsub.s32 0, %v308
        %v310 = vrot.slane %v306, %v309
        %312 = vset.pattern.permute.xlu0 2
        %313 = vperm.xlu0 %312, %v295
        %v314 = vpop.permute.xlu0 %313
        %v316 = vmin.f32 %v310, %v314
        %v317 = vlaneseq
        %v318 = vshrl.u32 %v317, 7
        %v319 = vsub.s32 0, %v318
        %v320 = vrot.slane %v305, %v319
        %321 = vset.pattern.permute.xlu0 0
        %322 = vperm.xlu0 %321, %v295
        %v323 = vpop.permute.xlu0 %322
        %v325 = vmax.f32 %v320, %v323
        %v326 = vsub.f32 %v316, %v325
        %v327 = vmax.f32 %v326, 0.0
        %v328 = vlaneseq
        %v329 = vshrl.u32 %v328, 7
        %v330 = vsub.s32 1, %v329
        %v331 = vrot.slane %v306, %v330
        %332 = vset.pattern.permute.xlu0 3
        %333 = vperm.xlu0 %332, %v295
        %v334 = vpop.permute.xlu0 %333
        %v336 = vmin.f32 %v331, %v334
        %v337 = vlaneseq
        %v338 = vshrl.u32 %v337, 7
        %v339 = vsub.s32 1, %v338
        %v340 = vrot.slane %v305, %v339
        %341 = vset.pattern.permute.xlu0 1
        %342 = vperm.xlu0 %341, %v295
        %v343 = vpop.permute.xlu0 %342
        %v345 = vmax.f32 %v340, %v343
        %v346 = vsub.f32 %v336, %v345
        %v347 = vmax.f32 %v346, 0.0
        %v348 = vmul.f32 %v327, %v347
        %v349 = vsub.f32 %v306, %v305
        %v351 = vrot.slane %v349, 1
        %v353 = vmul.f32 %v349, %v351
        %354 = vrot.lane.b32.xlu0 %v295, 2
        %v355 = vpop.permute.xlu0 %354
        %v357 = vsub.f32 %v295, %v355
        %359 = vrot.lane.b32.xlu0 %v357, 127
        %v360 = vpop.permute.xlu0 %359
        %v362 = vmul.f32 %v357, %v360
        %v363 = vlaneseq
        %v364 = vshrl.u32 %v363, 7
        %v365 = vsub.s32 0, %v364
        %v366 = vrot.slane %v353, %v365
        %368 = vset.pattern.permute.xlu0 2
        %369 = vperm.xlu0 %368, %v362
        %v370 = vpop.permute.xlu0 %369
        %v372 = vadd.f32 %v366, %v370
        %v373 = vsub.f32 %v372, %v348
        %v374 = vrcp.pop %v373
        %v375 = vmul.f32 %v348, %v374
        %v376 = vlaneseq
        %v377 = vshrl.u32 %v376, 7
        %v378 = vlaneseq
        %v379 = vand.u32 %v378, 127
        %vm380 = vcmask 1043456
        %v381 = vsel %vm380, %v375, -inf
        %382 = vmax.xlane.f32.xlu0 %v381
        %v383 = vpop.xlane.xlu0 %382
        %vm384 = vcmp.eq.f32.partialorder %v375, %v383
        %v385 = vsel %vm384, %v379, 128
        %v386 = vsel %vm380, %v385, 2147483647
        %v387 = vand.u32 %v386, 65535
        %v388 = vshra.s32 %v386, 16
        %v389 = vcvt.s32.f32 %v387
        %v390 = vcvt.s32.f32 %v388
        %391 = vmin.xlane.f32.xlu0 %v390
        %v392 = vpop.xlane.xlu0 %391
        %vm393 = vcmp.eq.f32.partialorder %v390, %v392
        %v394 = vsel %vm393, %v389, inf
        %395 = vmin.xlane.f32.xlu0 %v394
        %v396 = vpop.xlane.xlu0 %395
        %v397 = vcvt.f32.s32 %v396
        %v398 = vcvt.f32.s32 %v392
        %v399 = vshll.u32 %v398, 16
        %v400 = vadd.s32 %v399, %v397
        %v401 = vrot.slane %v381, 4
        %v402 = vmax.f32 %v381, %v401
        %v403 = vrot.slane %v402, 2
        %v404 = vmax.f32 %v402, %v403
        %v405 = vrot.slane %v404, 1
        %v406 = vmax.f32 %v404, %v405
        %vm407 = vcmp.eq.f32.partialorder %v375, %v406
        %v408 = vsel %vm407, %v377, 4
        %v409 = vsel %vm380, %v408, 2147483647
        %v410 = vrot.slane %v409, 4
        %vm411 = vcmp.lt.s32.totalorder %v409, %v410
        %v412 = vsel %vm411, %v409, %v410
        %v413 = vrot.slane %v412, 2
        %vm414 = vcmp.lt.s32.totalorder %v412, %v413
        %v415 = vsel %vm414, %v412, %v413
        %v416 = vrot.slane %v415, 1
        %vm417 = vcmp.lt.s32.totalorder %v415, %v416
        %v418 = vsel %vm417, %v415, %v416
        %vm419 = vcmp.eq.s32.totalorder %v379, %v400
        %v420 = vsel %vm419, 1, 0
        %v421 = vsel %vm380, %v420, 2147483648
        %v422 = vrot.slane %v421, 4
        %vm423 = vcmp.gt.s32.totalorder %v421, %v422
        %v424 = vsel %vm423, %v421, %v422
        %v425 = vrot.slane %v424, 2
        %vm426 = vcmp.gt.s32.totalorder %v424, %v425
        %v427 = vsel %vm426, %v424, %v425
        %v428 = vrot.slane %v427, 1
        %vm429 = vcmp.gt.s32.totalorder %v427, %v428
        %v430 = vsel %vm429, %v427, %v428
        %vm431 = vcmp.gt.s32.totalorder %v430, 0
        %v432 = vsel %vm419, %v377, 4294967295
        %v433 = vsel %vm380, %v432, 2147483648
        %v434 = vrot.slane %v433, 4
        %vm435 = vcmp.gt.s32.totalorder %v433, %v434
        %v436 = vsel %vm435, %v433, %v434
        %v437 = vrot.slane %v436, 2
        %vm438 = vcmp.gt.s32.totalorder %v436, %v437
        %v439 = vsel %vm438, %v436, %v437
        %v440 = vrot.slane %v439, 1
        %vm441 = vcmp.gt.s32.totalorder %v439, %v440
        %v442 = vsel %vm441, %v439, %v440
        %v443 = vsel %vm431, 2.0, %v406
        %v444 = vsel %vm431, %v442, %v418
        %vm445 = vcmp.eq.s32.totalorder %v377, %v444
        %v446 = vsel %vm445, 1, 0
        %v447 = vcvt.s32.f32 %v446
        %vm448 = vcmask 31744
        %v450 = vsel %vm448, %v296, 0
        %v453 = vsel %vm380, %v447, 0
        %455 = vmatprep.subr.mxu0 0.0
        %456 = vmatpush1.msra.mxu0 %v453
        %457 = vmatprep.subr.mxu0 0.0
        %458 = vmatpush1.msra.mxu0 0.0
        %459 = vmatprep.subr.mxu0 0.0
        %460 = vmatpush1.msra.mxu0 0.0
        %461 = vmatprep.subr.mxu0 0.0
        %462 = vmatpush1.msra.mxu0 0.0
        %463 = vmatprep.subr.mxu0 0.0
        %464 = vmatpush1.msra.mxu0 0.0
        %465 = vmatprep.subr.mxu0 0.0
        %466 = vmatpush1.msra.mxu0 0.0
        %467 = vmatprep.subr.mxu0 0.0
        %468 = vmatpush1.msra.mxu0 0.0
        %469 = vmatprep.subr.mxu0 0.0
        %470 = vmatpush1.msra.mxu0 0.0
        %471 = vmatprep.subr.mxu0 0.0
        %472 = vmatpush1.msra.mxu0 0.0
        %473 = vmatprep.subr.mxu0 0.0
        %474 = vmatpush1.msra.mxu0 0.0
        %475 = vmatprep.subr.mxu0 0.0
        %476 = vmatpush1.msra.mxu0 0.0
        %477 = vmatprep.subr.mxu0 0.0
        %478 = vmatpush1.msra.mxu0 0.0
        %479 = vmatprep.subr.mxu0 0.0
        %480 = vmatpush1.msra.mxu0 0.0
        %481 = vmatprep.subr.mxu0 0.0
        %482 = vmatpush1.msra.mxu0 0.0
        %483 = vmatprep.subr.mxu0 0.0
        %484 = vmatpush1.msra.mxu0 0.0
        %485 = vmatprep.subr.mxu0 0.0
        %486 = vmatpush1.msra.mxu0 0.0
        %487 = vmatprep.subr.mxu0 0.0
        %488 = vmatpush1.msra.mxu0 0.0
        %489 = vmatprep.subr.mxu0 0.0
        %490 = vmatpush1.msra.mxu0 0.0
        %491 = vmatprep.subr.mxu0 0.0
        %492 = vmatpush1.msra.mxu0 0.0
        %493 = vmatprep.subr.mxu0 0.0
        %494 = vmatpush1.msra.mxu0 0.0
        %495 = vmatprep.subr.mxu0 0.0
        %496 = vmatpush1.msra.mxu0 0.0
        %497 = vmatprep.subr.mxu0 0.0
        %498 = vmatpush1.msra.mxu0 0.0
        %499 = vmatprep.subr.mxu0 0.0
        %500 = vmatpush1.msra.mxu0 0.0
        %501 = vmatprep.subr.mxu0 0.0
        %502 = vmatpush1.msra.mxu0 0.0
        %503 = vmatprep.subr.mxu0 0.0
        %504 = vmatpush1.msra.mxu0 0.0
        %505 = vmatprep.subr.mxu0 0.0
        %506 = vmatpush1.msra.mxu0 0.0
        %507 = vmatprep.subr.mxu0 0.0
        %508 = vmatpush1.msra.mxu0 0.0
        %509 = vmatprep.subr.mxu0 0.0
        %510 = vmatpush1.msra.mxu0 0.0
        %511 = vmatprep.subr.mxu0 0.0
        %512 = vmatpush1.msra.mxu0 0.0
        %513 = vmatprep.subr.mxu0 0.0
        %514 = vmatpush1.msra.mxu0 0.0
        %515 = vmatprep.subr.mxu0 0.0
        %516 = vmatpush1.msra.mxu0 0.0
        %517 = vmatprep.subr.mxu0 0.0
        %518 = vmatpush1.msra.mxu0 0.0
        %519 = vmatprep.mubr.f32.mxu0 0.0
        %520 = vmatmul.mubr.f32.gmra.mrb[0].mxu0 %v450
        %v521 = vpop.f32.mrb[0].mxu0
        %v522 = vadd.f32 0.0, %v521
        %v523 = vpop.f32.mrb[0].mxu0
        %524 = vdwg.mxu0
        %vm525 = vcmp.lt.f32.partialorder %v443, 0.5
        %v526 = vadd.f32 %v522, 1.0
        %v527 = vsel %vm525, 0.0, %v526
        %vm528 = vcmp.gt.f32.partialorder %v527, 0.0
        %v529 = vsel %vm528, 1, 0
        %v530 = vcvt.s32.f32 %v529
        %vm531 = vcmask 1044484
        %v532 = vsel %vm531, %v530, 0.0
        %533 = vadd.xlane.f32.xlu0 %v532
        %v534 = vpop.xlane.xlu0 %533
        %v536 = vrot.slane %v522, 2
        %v538 = vadd.f32 %v522, %v536
        %v539 = vmul.f32 %v538, 0.5
        %v540 = vsub.f32 %v539, %v294
        %v541 = vmul.f32 %v294, 0.1
        %v543 = vrot.slane %v541, 2
        %v545 = vrcp.pop %v543
        %v546 = vmul.f32 %v540, %v545
        %v547 = vrot.slane %v522, 6
        %v549 = vsub.f32 %v522, %v547
        %v551 = vrot.slane %v549, 6
        %v554 = vrot.slane %v294, 6
        %v556 = vsel %vm528, %v551, %v554
        %v557 = vrot.slane %v549, 7
        %v559 = vrot.slane %v294, 7
        %v561 = vsel %vm528, %v557, %v559
        %v562 = vrcp.pop %v554
        %v563 = vmul.f32 %v556, %v562
        %v564 = vlog2.pop %v563
        %v565 = vmul.f32 %v564, 0.6931472
        %v566 = vrcp.pop 0.2
        %v567 = vmul.f32 %v565, %v566
        %v568 = vrcp.pop %v559
        %v569 = vmul.f32 %v561, %v568
        %v570 = vlog2.pop %v569
        %v571 = vmul.f32 %v570, 0.6931472
        %v572 = vmul.f32 %v571, %v566
        %v573 = vsub.f32 %v297, %v546
        %v574 = vand.u32 2147483647, %v573
        %vm575 = vcmp.lt.f32.partialorder %v574, 1.0
        %v576 = vmul.f32 %v573, 0.5
        %v577 = vmul.f32 %v576, %v573
        %v578 = vsub.f32 %v574, 0.5
        %v579 = vsel %vm575, %v577, %v578
        %v581 = vrot.slane %v579, 1
        %v583 = vadd.f32 %v579, %v581
        %v585 = vrot.slane %v567, 2
        %v587 = vsub.f32 %v297, %v585
        %v588 = vand.u32 2147483647, %v587
        %vm589 = vcmp.lt.f32.partialorder %v588, 1.0
        %v590 = vmul.f32 %v587, 0.5
        %v591 = vmul.f32 %v590, %v587
        %v592 = vsub.f32 %v588, 0.5
        %v593 = vsel %vm589, %v591, %v592
        %v595 = vrot.slane %v593, 2
        %v597 = vadd.f32 %v583, %v595
        %v599 = vrot.slane %v572, 1
        %v601 = vsub.f32 %v297, %v599
        %v602 = vand.u32 2147483647, %v601
        %vm603 = vcmp.lt.f32.partialorder %v602, 1.0
        %v604 = vmul.f32 %v601, 0.5
        %v605 = vmul.f32 %v604, %v601
        %v606 = vsub.f32 %v602, 0.5
        %v607 = vsel %vm603, %v605, %v606
        %v609 = vrot.slane %v607, 3
        %v611 = vadd.f32 %v597, %v609
        %v613 = vrot.slane %v530, 4
        %v615 = vmul.f32 %v611, %v613
        %vm616 = vcmask 1040384
        %v617 = vsel %vm616, %v615, 0.0
        %618 = vadd.xlane.f32.xlu0 %v617
        %v619 = vpop.xlane.xlu0 %618
        %vm620 = vcmask 1044480
        %v621 = vsel %vm620, %v300, -inf
        %v622 = vmax.f32 %v298, %v299
        %v623 = vmax.f32 %v622, %v621
        %v624 = vrot.slane %v623, 4
        %v625 = vmax.f32 %v623, %v624
        %v626 = vrot.slane %v625, 2
        %v627 = vmax.f32 %v625, %v626
        %v628 = vrot.slane %v627, 1
        %v629 = vmax.f32 %v627, %v628
        %v630 = vsub.f32 %v298, %v629
        %v631 = vsub.f32 %v299, %v629
        %v632 = vsub.f32 %v300, %v629
        %v633 = vmul.f32 %v630, 1.442695
        %v634 = vpow.pop %v633
        %v635 = vmul.f32 %v631, 1.442695
        %v636 = vpow.pop %v635
        %v637 = vmul.f32 %v632, 1.442695
        %v638 = vpow.pop %v637
        %v639 = vadd.f32 %v634, %v636
        %v640 = vsel %vm620, %v638, 0.0
        %v641 = vadd.f32 %v639, %v640
        %v642 = vrot.slane %v641, 4
        %v643 = vadd.f32 %v641, %v642
        %v644 = vrot.slane %v643, 2
        %v645 = vadd.f32 %v643, %v644
        %v646 = vrot.slane %v645, 1
        %v647 = vadd.f32 %v645, %v646
        %v648 = vlog2.pop %v647
        %v649 = vmul.f32 %v648, 0.6931472
        %v650 = vadd.f32 %v649, %v629
        %v651 = vadd.s32 %v377, 8
        %v652 = vadd.s32 %v377, 16
        %v653 = vcvt.f32.s32.to.zero.pseudo %v527
        %v654 = vlaneseq
        %v655 = vshrl.u32 %v654, 7
        %v656 = vsub.s32 4, %v655
        %v657 = vrot.slane %v653, %v656
        %vm658 = vcmp.eq.s32.totalorder %v377, %v657
        %vm659 = vcmp.eq.s32.totalorder %v651, %v657
        %vm660 = vcmp.eq.s32.totalorder %v652, %v657
        %v661 = vsel %vm658, 1, 0
        %v662 = vsel %vm659, 1, 0
        %v663 = vsel %vm660, 1, 0
        %v664 = vcvt.s32.f32 %v661
        %v665 = vcvt.s32.f32 %v662
        %v666 = vcvt.s32.f32 %v663
        %v667 = vmul.f32 %v298, %v664
        %v668 = vmul.f32 %v299, %v665
        %v669 = vmul.f32 %v300, %v666
        %v670 = vadd.f32 %v667, %v668
        %v671 = vsel %vm620, %v669, 0.0
        %v672 = vadd.f32 %v670, %v671
        %v673 = vrot.slane %v672, 4
        %v674 = vadd.f32 %v672, %v673
        %v675 = vrot.slane %v674, 2
        %v676 = vadd.f32 %v674, %v675
        %v677 = vrot.slane %v676, 1
        %v678 = vadd.f32 %v676, %v677
        %v679 = vsub.f32 %v650, %v678
        %v680 = vsel %vm528, -1.0, %v679
        %v681 = vmul.f32 %v534, 3.0
        %v682 = vmin.f32 %v681, 127.0
        %683 = vmax.xlane.f32.xlu0 %v679
        %v684 = vpop.xlane.xlu0 %683
        %v685 = vadd.f32 %v684, 1.0
        loop: start=0, step=1, limit=32
        $region41: #{tpu_custom_call.1} parent=39 // loop_pre_header
          _
        $region42: #{tpu_custom_call.1} parent=39 // loop_header
          %s687 = sphi 0, %s691
          %p688 = scmp.ge.s32.totalorder %s687, 32
          %v692 = vphi 0.0, %v703
          %v693 = vphi %v685, %v704
        $region43: #{tpu_custom_call.1} parent=39 // loop_header_branch
          %690 = sbr.rel (%p688) target = $region47
        $region44: #{tpu_custom_call.1} parent=39 // loop_body
          %v694 = vadd.f32 %v692, %v693
          %v695 = vmul.f32 %v694, 0.5
          %vm696 = vcmp.ge.f32.partialorder %v680, %v695
          %v697 = vsel %vm696, 1, 0
          %v698 = vcvt.s32.f32 %v697
          %v699 = vsel %vm531, %v698, 0.0
          %700 = vadd.xlane.f32.xlu0 %v699
          %v701 = vpop.xlane.xlu0 %700
          %vm702 = vcmp.ge.f32.partialorder %v701, %v682
          %v703 = vsel %vm702, %v695, %v692
          %v704 = vsel %vm702, %v693, %v695
        $region45: #{tpu_custom_call.1} parent=39 // loop_footer
          %s691 = sadd.s32 1, %s687
        $region46: #{tpu_custom_call.1} parent=39 // loop_footer_branch
          %686 = sbr.rel target = $region42
        $region47: #{tpu_custom_call.1} parent=39 // loop_exit
          _
        %vm705 = vcmp.ge.f32.partialorder %v680, %v692
        %vm706 = vmor %vm528, %vm705
        %v707 = vsel %vm706, 1, 0
        %v708 = vcvt.s32.f32 %v707
        %v709 = vmul.f32 %v679, %v708
        %v710 = vsel %vm531, %v709, 0.0
        %711 = vadd.xlane.f32.xlu0 %v710
        %v712 = vpop.xlane.xlu0 %711
        %v713 = vadd.f32 %v619, 0.0
        %v714 = vadd.f32 %v712, 0.0
        %v715 = vadd.f32 %v534, 0.0
        %s716 = scalar_lea.vmem %s273, 4
        %v717 = vld [vmem:[%s716] sm:$0xf]
        %s718 = scalar_lea.vmem %s279, 8
        %v719 = vld [vmem:[%s718] sm:$0x1f]
        %s720 = scalar_lea.vmem %s285, 4
        %v721 = vld [vmem:[%s720] sm:$0xf]
        %s722 = scalar_lea.vmem %s292, 24
        %v723 = vld [vmem:[%s722] sm:$0xff]
        %v724 = vld [vmem:[%s722 + $0x8] sm:$0xff]
        %v725 = vld [vmem:[%s722 + $0x10] sm:$0x1f]
        %727 = vset.pattern.permute.xlu0 2
        %728 = vperm.xlu0 %727, %v717
        %v729 = vpop.permute.xlu0 %728
        %v731 = vmin.f32 %v310, %v729
        %732 = vset.pattern.permute.xlu0 0
        %733 = vperm.xlu0 %732, %v717
        %v734 = vpop.permute.xlu0 %733
        %v736 = vmax.f32 %v320, %v734
        %v737 = vsub.f32 %v731, %v736
        %v738 = vmax.f32 %v737, 0.0
        %739 = vset.pattern.permute.xlu0 3
        %740 = vperm.xlu0 %739, %v717
        %v741 = vpop.permute.xlu0 %740
        %v743 = vmin.f32 %v331, %v741
        %744 = vset.pattern.permute.xlu0 1
        %745 = vperm.xlu0 %744, %v717
        %v746 = vpop.permute.xlu0 %745
        %v748 = vmax.f32 %v340, %v746
        %v749 = vsub.f32 %v743, %v748
        %v750 = vmax.f32 %v749, 0.0
        %v751 = vmul.f32 %v738, %v750
        %752 = vrot.lane.b32.xlu0 %v717, 2
        %v753 = vpop.permute.xlu0 %752
        %v755 = vsub.f32 %v717, %v753
        %757 = vrot.lane.b32.xlu0 %v755, 127
        %v758 = vpop.permute.xlu0 %757
        %v760 = vmul.f32 %v755, %v758
        %762 = vset.pattern.permute.xlu0 2
        %763 = vperm.xlu0 %762, %v760
        %v764 = vpop.permute.xlu0 %763
        %v766 = vadd.f32 %v366, %v764
        %v767 = vsub.f32 %v766, %v751
        %v768 = vrcp.pop %v767
        %v769 = vmul.f32 %v751, %v768
        %v770 = vsel %vm380, %v769, -inf
        %771 = vmax.xlane.f32.xlu0 %v770
        %v772 = vpop.xlane.xlu0 %771
        %vm773 = vcmp.eq.f32.partialorder %v769, %v772
        %v774 = vsel %vm773, %v379, 128
        %v775 = vsel %vm380, %v774, 2147483647
        %v776 = vand.u32 %v775, 65535
        %v777 = vshra.s32 %v775, 16
        %v778 = vcvt.s32.f32 %v776
        %v779 = vcvt.s32.f32 %v777
        %780 = vmin.xlane.f32.xlu0 %v779
        %v781 = vpop.xlane.xlu0 %780
        %vm782 = vcmp.eq.f32.partialorder %v779, %v781
        %v783 = vsel %vm782, %v778, inf
        %784 = vmin.xlane.f32.xlu0 %v783
        %v785 = vpop.xlane.xlu0 %784
        %v786 = vcvt.f32.s32 %v785
        %v787 = vcvt.f32.s32 %v781
        %v788 = vshll.u32 %v787, 16
        %v789 = vadd.s32 %v788, %v786
        %v790 = vrot.slane %v770, 4
        %v791 = vmax.f32 %v770, %v790
        %v792 = vrot.slane %v791, 2
        %v793 = vmax.f32 %v791, %v792
        %v794 = vrot.slane %v793, 1
        %v795 = vmax.f32 %v793, %v794
        %vm796 = vcmp.eq.f32.partialorder %v769, %v795
        %v797 = vsel %vm796, %v377, 4
        %v798 = vsel %vm380, %v797, 2147483647
        %v799 = vrot.slane %v798, 4
        %vm800 = vcmp.lt.s32.totalorder %v798, %v799
        %v801 = vsel %vm800, %v798, %v799
        %v802 = vrot.slane %v801, 2
        %vm803 = vcmp.lt.s32.totalorder %v801, %v802
        %v804 = vsel %vm803, %v801, %v802
        %v805 = vrot.slane %v804, 1
        %vm806 = vcmp.lt.s32.totalorder %v804, %v805
        %v807 = vsel %vm806, %v804, %v805
        %vm808 = vcmp.eq.s32.totalorder %v379, %v789
        %v809 = vsel %vm808, 1, 0
        %v810 = vsel %vm380, %v809, 2147483648
        %v811 = vrot.slane %v810, 4
        %vm812 = vcmp.gt.s32.totalorder %v810, %v811
        %v813 = vsel %vm812, %v810, %v811
        %v814 = vrot.slane %v813, 2
        %vm815 = vcmp.gt.s32.totalorder %v813, %v814
        %v816 = vsel %vm815, %v813, %v814
        %v817 = vrot.slane %v816, 1
        %vm818 = vcmp.gt.s32.totalorder %v816, %v817
        %v819 = vsel %vm818, %v816, %v817
        %vm820 = vcmp.gt.s32.totalorder %v819, 0
        %v821 = vsel %vm808, %v377, 4294967295
        %v822 = vsel %vm380, %v821, 2147483648
        %v823 = vrot.slane %v822, 4
        %vm824 = vcmp.gt.s32.totalorder %v822, %v823
        %v825 = vsel %vm824, %v822, %v823
        %v826 = vrot.slane %v825, 2
        %vm827 = vcmp.gt.s32.totalorder %v825, %v826
        %v828 = vsel %vm827, %v825, %v826
        %v829 = vrot.slane %v828, 1
        %vm830 = vcmp.gt.s32.totalorder %v828, %v829
        %v831 = vsel %vm830, %v828, %v829
        %v832 = vsel %vm820, 2.0, %v795
        %v833 = vsel %vm820, %v831, %v807
        %vm834 = vcmp.eq.s32.totalorder %v377, %v833
        %v835 = vsel %vm834, 1, 0
        %v836 = vcvt.s32.f32 %v835
        %v838 = vsel %vm448, %v719, 0
        %v841 = vsel %vm380, %v836, 0
        %843 = vmatprep.subr.mxu0 0.0
        %844 = vmatpush1.msra.mxu0 %v841
        %845 = vmatprep.subr.mxu0 0.0
        %846 = vmatpush1.msra.mxu0 0.0
        %847 = vmatprep.subr.mxu0 0.0
        %848 = vmatpush1.msra.mxu0 0.0
        %849 = vmatprep.subr.mxu0 0.0
        %850 = vmatpush1.msra.mxu0 0.0
        %851 = vmatprep.subr.mxu0 0.0
        %852 = vmatpush1.msra.mxu0 0.0
        %853 = vmatprep.subr.mxu0 0.0
        %854 = vmatpush1.msra.mxu0 0.0
        %855 = vmatprep.subr.mxu0 0.0
        %856 = vmatpush1.msra.mxu0 0.0
        %857 = vmatprep.subr.mxu0 0.0
        %858 = vmatpush1.msra.mxu0 0.0
        %859 = vmatprep.subr.mxu0 0.0
        %860 = vmatpush1.msra.mxu0 0.0
        %861 = vmatprep.subr.mxu0 0.0
        %862 = vmatpush1.msra.mxu0 0.0
        %863 = vmatprep.subr.mxu0 0.0
        %864 = vmatpush1.msra.mxu0 0.0
        %865 = vmatprep.subr.mxu0 0.0
        %866 = vmatpush1.msra.mxu0 0.0
        %867 = vmatprep.subr.mxu0 0.0
        %868 = vmatpush1.msra.mxu0 0.0
        %869 = vmatprep.subr.mxu0 0.0
        %870 = vmatpush1.msra.mxu0 0.0
        %871 = vmatprep.subr.mxu0 0.0
        %872 = vmatpush1.msra.mxu0 0.0
        %873 = vmatprep.subr.mxu0 0.0
        %874 = vmatpush1.msra.mxu0 0.0
        %875 = vmatprep.subr.mxu0 0.0
        %876 = vmatpush1.msra.mxu0 0.0
        %877 = vmatprep.subr.mxu0 0.0
        %878 = vmatpush1.msra.mxu0 0.0
        %879 = vmatprep.subr.mxu0 0.0
        %880 = vmatpush1.msra.mxu0 0.0
        %881 = vmatprep.subr.mxu0 0.0
        %882 = vmatpush1.msra.mxu0 0.0
        %883 = vmatprep.subr.mxu0 0.0
        %884 = vmatpush1.msra.mxu0 0.0
        %885 = vmatprep.subr.mxu0 0.0
        %886 = vmatpush1.msra.mxu0 0.0
        %887 = vmatprep.subr.mxu0 0.0
        %888 = vmatpush1.msra.mxu0 0.0
        %889 = vmatprep.subr.mxu0 0.0
        %890 = vmatpush1.msra.mxu0 0.0
        %891 = vmatprep.subr.mxu0 0.0
        %892 = vmatpush1.msra.mxu0 0.0
        %893 = vmatprep.subr.mxu0 0.0
        %894 = vmatpush1.msra.mxu0 0.0
        %895 = vmatprep.subr.mxu0 0.0
        %896 = vmatpush1.msra.mxu0 0.0
        %897 = vmatprep.subr.mxu0 0.0
        %898 = vmatpush1.msra.mxu0 0.0
        %899 = vmatprep.subr.mxu0 0.0
        %900 = vmatpush1.msra.mxu0 0.0
        %901 = vmatprep.subr.mxu0 0.0
        %902 = vmatpush1.msra.mxu0 0.0
        %903 = vmatprep.subr.mxu0 0.0
        %904 = vmatpush1.msra.mxu0 0.0
        %905 = vmatprep.subr.mxu0 0.0
        %906 = vmatpush1.msra.mxu0 0.0
        %907 = vmatprep.mubr.f32.mxu0 0.0
        %908 = vmatmul.mubr.f32.gmra.mrb[0].mxu0 %v838
        %v909 = vpop.f32.mrb[0].mxu0
        %v910 = vadd.f32 0.0, %v909
        %v911 = vpop.f32.mrb[0].mxu0
        %912 = vdwg.mxu0
        %vm913 = vcmp.lt.f32.partialorder %v832, 0.5
        %v914 = vadd.f32 %v910, 1.0
        %v915 = vsel %vm913, 0.0, %v914
        %vm916 = vcmp.gt.f32.partialorder %v915, 0.0
        %v917 = vsel %vm916, 1, 0
        %v918 = vcvt.s32.f32 %v917
        %v919 = vsel %vm531, %v918, 0.0
        %920 = vadd.xlane.f32.xlu0 %v919
        %v921 = vpop.xlane.xlu0 %920
        %v923 = vrot.slane %v910, 2
        %v925 = vadd.f32 %v910, %v923
        %v926 = vmul.f32 %v925, 0.5
        %v927 = vsub.f32 %v926, %v294
        %v928 = vmul.f32 %v927, %v545
        %v929 = vrot.slane %v910, 6
        %v931 = vsub.f32 %v910, %v929
        %v933 = vrot.slane %v931, 6
        %v935 = vsel %vm916, %v933, %v554
        %v936 = vrot.slane %v931, 7
        %v938 = vsel %vm916, %v936, %v559
        %v939 = vmul.f32 %v935, %v562
        %v940 = vlog2.pop %v939
        %v941 = vmul.f32 %v940, 0.6931472
        %v942 = vmul.f32 %v941, %v566
        %v943 = vmul.f32 %v938, %v568
        %v944 = vlog2.pop %v943
        %v945 = vmul.f32 %v944, 0.6931472
        %v946 = vmul.f32 %v945, %v566
        %v947 = vsub.f32 %v721, %v928
        %v948 = vand.u32 2147483647, %v947
        %vm949 = vcmp.lt.f32.partialorder %v948, 1.0
        %v950 = vmul.f32 %v947, 0.5
        %v951 = vmul.f32 %v950, %v947
        %v952 = vsub.f32 %v948, 0.5
        %v953 = vsel %vm949, %v951, %v952
        %v955 = vrot.slane %v953, 1
        %v957 = vadd.f32 %v953, %v955
        %v959 = vrot.slane %v942, 2
        %v961 = vsub.f32 %v721, %v959
        %v962 = vand.u32 2147483647, %v961
        %vm963 = vcmp.lt.f32.partialorder %v962, 1.0
        %v964 = vmul.f32 %v961, 0.5
        %v965 = vmul.f32 %v964, %v961
        %v966 = vsub.f32 %v962, 0.5
        %v967 = vsel %vm963, %v965, %v966
        %v969 = vrot.slane %v967, 2
        %v971 = vadd.f32 %v957, %v969
        %v973 = vrot.slane %v946, 1
        %v975 = vsub.f32 %v721, %v973
        %v976 = vand.u32 2147483647, %v975
        %vm977 = vcmp.lt.f32.partialorder %v976, 1.0
        %v978 = vmul.f32 %v975, 0.5
        %v979 = vmul.f32 %v978, %v975
        %v980 = vsub.f32 %v976, 0.5
        %v981 = vsel %vm977, %v979, %v980
        %v983 = vrot.slane %v981, 3
        %v985 = vadd.f32 %v971, %v983
        %v987 = vrot.slane %v918, 4
        %v989 = vmul.f32 %v985, %v987
        %v990 = vsel %vm616, %v989, 0.0
        %991 = vadd.xlane.f32.xlu0 %v990
        %v992 = vpop.xlane.xlu0 %991
        %v993 = vsel %vm620, %v725, -inf
        %v994 = vmax.f32 %v723, %v724
        %v995 = vmax.f32 %v994, %v993
        %v996 = vrot.slane %v995, 4
        %v997 = vmax.f32 %v995, %v996
        %v998 = vrot.slane %v997, 2
        %v999 = vmax.f32 %v997, %v998
        %v1000 = vrot.slane %v999, 1
        %v1001 = vmax.f32 %v999, %v1000
        %v1002 = vsub.f32 %v723, %v1001
        %v1003 = vsub.f32 %v724, %v1001
        %v1004 = vsub.f32 %v725, %v1001
        %v1005 = vmul.f32 %v1002, 1.442695
        %v1006 = vpow.pop %v1005
        %v1007 = vmul.f32 %v1003, 1.442695
        %v1008 = vpow.pop %v1007
        %v1009 = vmul.f32 %v1004, 1.442695
        %v1010 = vpow.pop %v1009
        %v1011 = vadd.f32 %v1006, %v1008
        %v1012 = vsel %vm620, %v1010, 0.0
        %v1013 = vadd.f32 %v1011, %v1012
        %v1014 = vrot.slane %v1013, 4
        %v1015 = vadd.f32 %v1013, %v1014
        %v1016 = vrot.slane %v1015, 2
        %v1017 = vadd.f32 %v1015, %v1016
        %v1018 = vrot.slane %v1017, 1
        %v1019 = vadd.f32 %v1017, %v1018
        %v1020 = vlog2.pop %v1019
        %v1021 = vmul.f32 %v1020, 0.6931472
        %v1022 = vadd.f32 %v1021, %v1001
        %v1023 = vcvt.f32.s32.to.zero.pseudo %v915
        %v1024 = vlaneseq
        %v1025 = vshrl.u32 %v1024, 7
        %v1026 = vsub.s32 4, %v1025
        %v1027 = vrot.slane %v1023, %v1026
        %vm1028 = vcmp.eq.s32.totalorder %v377, %v1027
        %vm1029 = vcmp.eq.s32.totalorder %v651, %v1027
        %vm1030 = vcmp.eq.s32.totalorder %v652, %v1027
        %v1031 = vsel %vm1028, 1, 0
        %v1032 = vsel %vm1029, 1, 0
        %v1033 = vsel %vm1030, 1, 0
        %v1034 = vcvt.s32.f32 %v1031
        %v1035 = vcvt.s32.f32 %v1032
        %v1036 = vcvt.s32.f32 %v1033
        %v1037 = vmul.f32 %v723, %v1034
        %v1038 = vmul.f32 %v724, %v1035
        %v1039 = vmul.f32 %v725, %v1036
        %v1040 = vadd.f32 %v1037, %v1038
        %v1041 = vsel %vm620, %v1039, 0.0
        %v1042 = vadd.f32 %v1040, %v1041
        %v1043 = vrot.slane %v1042, 4
        %v1044 = vadd.f32 %v1042, %v1043
        %v1045 = vrot.slane %v1044, 2
        %v1046 = vadd.f32 %v1044, %v1045
        %v1047 = vrot.slane %v1046, 1
        %v1048 = vadd.f32 %v1046, %v1047
        %v1049 = vsub.f32 %v1022, %v1048
        %v1050 = vsel %vm916, -1.0, %v1049
        %v1051 = vmul.f32 %v921, 3.0
        %v1052 = vmin.f32 %v1051, 127.0
        %1053 = vmax.xlane.f32.xlu0 %v1049
        %v1054 = vpop.xlane.xlu0 %1053
        %v1055 = vadd.f32 %v1054, 1.0
        loop: start=0, step=1, limit=32
        $region48: #{tpu_custom_call.1} parent=39 // loop_pre_header
          _
        $region49: #{tpu_custom_call.1} parent=39 // loop_header
          %s1057 = sphi 0, %s1061
          %p1058 = scmp.ge.s32.totalorder %s1057, 32
          %v1062 = vphi 0.0, %v1073
          %v1063 = vphi %v1055, %v1074
        $region50: #{tpu_custom_call.1} parent=39 // loop_header_branch
          %1060 = sbr.rel (%p1058) target = $region54
        $region51: #{tpu_custom_call.1} parent=39 // loop_body
          %v1064 = vadd.f32 %v1062, %v1063
          %v1065 = vmul.f32 %v1064, 0.5
          %vm1066 = vcmp.ge.f32.partialorder %v1050, %v1065
          %v1067 = vsel %vm1066, 1, 0
          %v1068 = vcvt.s32.f32 %v1067
          %v1069 = vsel %vm531, %v1068, 0.0
          %1070 = vadd.xlane.f32.xlu0 %v1069
          %v1071 = vpop.xlane.xlu0 %1070
          %vm1072 = vcmp.ge.f32.partialorder %v1071, %v1052
          %v1073 = vsel %vm1072, %v1065, %v1062
          %v1074 = vsel %vm1072, %v1063, %v1065
        $region52: #{tpu_custom_call.1} parent=39 // loop_footer
          %s1061 = sadd.s32 1, %s1057
        $region53: #{tpu_custom_call.1} parent=39 // loop_footer_branch
          %1056 = sbr.rel target = $region49
        $region54: #{tpu_custom_call.1} parent=39 // loop_exit
          _
        %vm1075 = vcmp.ge.f32.partialorder %v1050, %v1062
        %vm1076 = vmor %vm916, %vm1075
        %v1077 = vsel %vm1076, 1, 0
        %v1078 = vcvt.s32.f32 %v1077
        %v1079 = vmul.f32 %v1049, %v1078
        %v1080 = vsel %vm531, %v1079, 0.0
        %1081 = vadd.xlane.f32.xlu0 %v1080
        %v1082 = vpop.xlane.xlu0 %1081
        %v1083 = vadd.f32 %v713, %v992
        %v1084 = vadd.f32 %v714, %v1082
        %v1085 = vadd.f32 %v715, %v921
        %vm1086 = vcmp.eq.s32.totalorder %v379, 0
        %v1087 = vlaneseq
        %v1088 = vshrl.u32 %v1087, 7
        %v1089 = vsub.s32 0, %v1088
        %v1090 = vrot.slane %v1083, %v1089
        %v1091 = vsel %vm1086, %v1090, 0.0
        %vm1092 = vcmp.eq.s32.totalorder %v379, 1
        %v1093 = vlaneseq
        %v1094 = vshrl.u32 %v1093, 7
        %v1095 = vsub.s32 4, %v1094
        %v1096 = vrot.slane %v1084, %v1095
        %v1097 = vsel %vm1092, %v1096, 0.0
        %v1098 = vadd.f32 %v1091, %v1097
        %vm1099 = vcmp.eq.s32.totalorder %v379, 2
        %v1100 = vlaneseq
        %v1101 = vshrl.u32 %v1100, 7
        %v1102 = vsub.s32 4, %v1101
        %v1103 = vrot.slane %v1085, %v1102
        %v1104 = vsel %vm1099, %v1103, 0.0
        %v1105 = vadd.f32 %v1098, %v1104
        %1106 = vst [vmem:[%s268] sm:$0xff] %v1105
        %s1107 = sand.u32 %s152, 1
        %s1108 = scalar_lea.sflag [#allocation3], %s1107
        %s1109 = sand.u32 %s152, 1
        %s1110 = smul.addr %s1109, 8
        %s1111 = scalar_lea.vmem [#allocation2], %s1110
        // Predicated region
        $region55: #{tpu_custom_call.1} parent=39 // pred_check
          %p1112 = pneg %p162
        $region56: #{tpu_custom_call.1} parent=39 // pred_check_branch
          %1114 = sbr.rel (%p1112) target = $region58
        $region57: #{tpu_custom_call.1} parent=39 // pred_region
          %s1116 = ssub.s32 128, 128
          %1117 = vsyncadd %s1108, %s1116
          %s1118 = smul.addr %s19, 128
          %s1119 = scalar_lea.hbm %s5, %s1118
          %s1121 = sshll.u32 %s1111, 4
          %s1122 = int_to_ptr.vmem [resolvable:$true] %s1121
          %1124 = dma.vmem_to_hbm [thread:$0]  %s1122, 128, %s1119, %s1108
        $region58: #{tpu_custom_call.1} parent=39 // pred_fallthru
          _
      $region40: #{tpu_custom_call.1} parent=5 // pred_fallthru
        _
      %p1125 = scmp.le.s32.totalorder 2, %s14
      // Predicated region
      $region59: #{tpu_custom_call.1} parent=5 // pred_check
        %p1126 = pneg %p1125
      $region60: #{tpu_custom_call.1} parent=5 // pred_check_branch
        %1128 = sbr.rel (%p1126) target = $region62
      $region61: #{tpu_custom_call.1} parent=5 // pred_region
        %s1129 = ssub.s32 %s14, 2
        // Predicated region
        $region63: #{tpu_custom_call.1} parent=61 // pred_check
          %p1130 = pneg %p168
        $region64: #{tpu_custom_call.1} parent=61 // pred_check_branch
          %1132 = sbr.rel (%p1130) target = $region66
        $region65: #{tpu_custom_call.1} parent=61 // pred_region
          %s1133 = sand.u32 %s153, 1
          %s1134 = scalar_lea.sflag [#allocation3], %s1133
          %s1135 = sand.u32 %s153, 1
          %s1136 = smul.addr %s1135, 8
          %s1137 = scalar_lea.vmem [#allocation2], %s1136
          %1138 = dma.done %s1134, 128
        $region66: #{tpu_custom_call.1} parent=61 // pred_fallthru
          _
      $region62: #{tpu_custom_call.1} parent=5 // pred_fallthru
        _
    $region6: #{tpu_custom_call.1} parent=1 // loop_footer
      %s18 = sadd.s32 1, %s14
    $region7: #{tpu_custom_call.1} parent=1 // loop_footer_branch
      %13 = sbr.rel target = $region3
    $region8: #{tpu_custom_call.1} parent=1 // loop_exit
      _
    %1139 = vsyncpa [#allocation3], 1
    %s1140 = scalar_lea.sflag [#allocation3], 1
    %1141 = vsyncpa %s1140, 1

</llo_original>
